<compile_context>
chip_gen: v7x
topology: tpu7x:2x2x1
jax: 0.10.0
libtpu: 0.0.40
codegen_flags: <defaults>
</compile_context>

<pallas_src>
import jax
import jax.numpy as jnp
from jax.experimental import pallas as pl
from jax.experimental.pallas import tpu as pltpu

STATE_DIM = 7
ACTION_DIM = 1
IN_DIM = STATE_DIM + ACTION_DIM          # 8
H1, H2, H3 = 512, 256, 64
H3P = 128                                # layer-3 zero-padded to 128 lanes
OUT_LANES = 128                          # lane width of the in-kernel head slab
OUT_W = 8                                # lanes actually written back (q1,q2 in 0,1)
TILE_MAX = 1024                          # max batch tile

# --- static, 128-aligned offsets into the packed (1, 2944) f32 vector ------
OFF_B1 = 0                       # fused layer-1 bias           (1024)
OFF_W1A = OFF_B1 + 2 * H1        # fused layer-1 action row     (1024)  = 1024
OFF_B2 = OFF_W1A + 2 * H1        # branch-1 layer-2 bias        (256)   = 2048
OFF_B5 = OFF_B2 + H2             # branch-2 layer-2 bias        (256)   = 2304
OFF_B3 = OFF_B5 + H2             # branch-1 layer-3 bias pad    (128)   = 2560
OFF_B6 = OFF_B3 + H3P            # branch-2 layer-3 bias pad    (128)   = 2688
OFF_BQ = OFF_B6 + H3P            # head biases in lanes 0,1     (128)   = 2816
BVEC_LEN = OFF_BQ + OUT_LANES    #                                      = 2944


def _critic_kernel(st_ref, ac_ref, w1s_ref, w25_ref, w36_ref, wh_ref,
                   bvec_ref, out_ref):
    f32, bf16 = jnp.float32, jnp.bfloat16

    b1 = bvec_ref[:, OFF_B1:OFF_B1 + 2 * H1]            # (1, 1024)
    w1a = bvec_ref[:, OFF_W1A:OFF_W1A + 2 * H1]         # (1, 1024)
    b2 = bvec_ref[:, OFF_B2:OFF_B2 + H2]                # (1, 256)
    b5 = bvec_ref[:, OFF_B5:OFF_B5 + H2]                # (1, 256)
    b3 = bvec_ref[:, OFF_B3:OFF_B3 + H3P]               # (1, 128)
    b6 = bvec_ref[:, OFF_B6:OFF_B6 + H3P]               # (1, 128)
    bq = bvec_ref[:, OFF_BQ:OFF_BQ + OUT_LANES]         # (1, 128): [bq1, bq2, 0...]

    st = st_ref[...]                                    # (tb, 7)  f32
    ac = ac_ref[...]                                    # (tb, 1)  f32

    # ---- layer 1, both branches fused.  cat([s,a]) @ W1 == s @ W1[:7] + a*W1[7]
    h1 = jnp.dot(st.astype(bf16), w1s_ref[...], preferred_element_type=f32)
    h1 = jnp.maximum(h1 + ac * w1a + b1, 0.0)           # (tb, 1024)
    h1a = h1[:, :H1].astype(bf16)
    h1b = h1[:, H1:].astype(bf16)

    # ---- layer 2 per branch: (tb, 512) @ (512, 256) ------------------------
    h2a = jnp.maximum(
        jnp.dot(h1a, w25_ref[:, :H2], preferred_element_type=f32) + b2, 0.0
    ).astype(bf16)
    h2b = jnp.maximum(
        jnp.dot(h1b, w25_ref[:, H2:], preferred_element_type=f32) + b5, 0.0
    ).astype(bf16)

    # ---- layer 3 per branch (64 -> padded 128): (tb, 256) @ (256, 128) -----
    h3a = jnp.maximum(
        jnp.dot(h2a, w36_ref[:, :H3P], preferred_element_type=f32) + b3, 0.0
    ).astype(bf16)
    h3b = jnp.maximum(
        jnp.dot(h2b, w36_ref[:, H3P:], preferred_element_type=f32) + b6, 0.0
    ).astype(bf16)

    # ---- heads fused on the MXU: q1 lands in lane 0, q2 in lane 1 ----------
    q = (jnp.dot(h3a, wh_ref[:H3P, :], preferred_element_type=f32)
         + jnp.dot(h3b, wh_ref[H3P:, :], preferred_element_type=f32)
         + bq)                                          # (tb, 128)
    out_ref[...] = q[:, :OUT_W]                         # narrow (tb, 8) writeback


# --------------------------- parameter handling ----------------------------
def init_linear(key, fan_in, fan_out):
    """PyTorch nn.Linear default init U(-1/sqrt(fan_in), 1/sqrt(fan_in)).
    Weight returned already transposed to (in, out); bias as (out,)."""
    kw, kb = jax.random.split(key)
    bound = float(fan_in) ** -0.5
    w = jax.random.uniform(kw, (fan_in, fan_out), jnp.float32, -bound, bound)
    b = jax.random.uniform(kb, (fan_out,), jnp.float32, -bound, bound)
    return w, b


def init_critic_params(key):
    dims = [(IN_DIM, H1), (H1, H2), (H2, H3), (H3, 1)]
    keys = jax.random.split(key, 8)
    layers = [init_linear(k, fi, fo) for k, (fi, fo) in zip(keys, dims + dims)]
    return layers        # 8 (w, b) pairs: l1, l2, l3, q1, l4, l5, l6, q2


def pack_critic_params(layers, weight_dtype=jnp.bfloat16):
    """Pack the 8 linears into 5 kernel operands (fused / lane-stacked / padded)."""
    (w1, b1), (w2, b2), (w3, b3), (wq1, bq1), \
        (w4, b4), (w5, b5), (w6, b6), (wq2, bq2) = layers

    w1f = jnp.concatenate([w1, w4], axis=1)                        # (8, 1024)
    w1s = w1f[:STATE_DIM, :]                                       # (7, 1024)
    w1a = w1f[STATE_DIM, :]                                        # (1024,)
    w25 = jnp.concatenate([w2, w5], axis=1)                        # (512, 512)
    w36 = jnp.concatenate([jnp.pad(w3, ((0, 0), (0, H3P - H3))),
                           jnp.pad(w6, ((0, 0), (0, H3P - H3)))],
                          axis=1)                                  # (256, 256)

    wh = jnp.zeros((2 * H3P, OUT_LANES), jnp.float32)              # (256, 128)
    wh = wh.at[:H3, 0].set(wq1[:, 0])                              # q1 -> lane 0
    wh = wh.at[H3P:H3P + H3, 1].set(wq2[:, 0])                     # q2 -> lane 1

    bqblk = jnp.zeros((OUT_LANES,), jnp.float32)
    bqblk = bqblk.at[0].set(bq1[0]).at[1].set(bq2[0])
    bvec = jnp.concatenate([
        jnp.concatenate([b1, b4]),                                 # 1024
        w1a,                                                       # 1024 (f32 action row)
        b2, b5,                                                    # 256 + 256
        jnp.pad(b3, (0, H3P - H3)), jnp.pad(b6, (0, H3P - H3)),    # 128 + 128
        bqblk,                                                     # 128
    ])[None, :]                                                    # (1, 2944)
    assert bvec.shape[1] == BVEC_LEN

    return (w1s.astype(weight_dtype), w25.astype(weight_dtype),
            w36.astype(weight_dtype), wh.astype(weight_dtype),
            bvec.astype(jnp.float32))


# ------------------------------- forward -----------------------------------
def _round_up(x, m):
    return (x + m - 1) // m * m


def _pick_tile(batch):
    if batch <= 64:
        return _round_up(batch, 8)                 # single tile, minimal pad
    if batch <= 2 * TILE_MAX:
        # exactly two "parallel" tiles -> both v7x TensorCores get work
        return _round_up(pl.cdiv(batch, 2), 8)
    return TILE_MAX                                # big batches: 1024-row tiles


def critic_forward(state, action, packed):
    w1s, w25, w36, wh, bvec = packed
    batch = state.shape[0]

    tb = _pick_tile(batch)
    padded = _round_up(batch, tb)
    grid = (padded // tb,)

    st = state.astype(jnp.float32)
    ac = action.astype(jnp.float32)
    if padded != batch:                            # masked remainder via zero-pad
        st = jnp.pad(st, ((0, padded - batch), (0, 0)))
        ac = jnp.pad(ac, ((0, padded - batch), (0, 0)))

    full = lambda shape: pl.BlockSpec(shape, lambda i: (0, 0))

    out = pl.pallas_call(
        _critic_kernel,
        out_shape=jax.ShapeDtypeStruct((padded, OUT_W), jnp.float32),
        grid=grid,
        in_specs=[
            pl.BlockSpec((tb, STATE_DIM), lambda i: (i, 0)),
            pl.BlockSpec((tb, ACTION_DIM), lambda i: (i, 0)),
            full(w1s.shape),
            full(w25.shape),
            full(w36.shape),
            full(wh.shape),
            full(bvec.shape),
        ],
        out_specs=pl.BlockSpec((tb, OUT_W), lambda i: (i, 0)),
        compiler_params=pltpu.CompilerParams(
            dimension_semantics=("parallel",),
            vmem_limit_bytes=48 * 1024 * 1024),
    )(st, ac, w1s, w25, w36, wh, bvec)

    q = out[:batch, :2]                            # single slice of the result
    return q[:, 0:1], q[:, 1:2]


def critic_reference(state, action, layers):
    """Pure-JAX reference matching the PyTorch module."""
    sa = jnp.concatenate([state, action], axis=1).astype(jnp.float32)
    (w1, b1), (w2, b2), (w3, b3), (wq1, bq1), \
        (w4, b4), (w5, b5), (w6, b6), (wq2, bq2) = layers

    def branch(wa, ba, wb, bb, wc, bc, wq, bq):
        h = jax.nn.relu(sa @ wa + ba)
        h = jax.nn.relu(h @ wb + bb)
        h = jax.nn.relu(h @ wc + bc)
        return h @ wq + bq

    return (branch(w1, b1, w2, b2, w3, b3, wq1, bq1),
            branch(w4, b4, w5, b5, w6, b6, wq2, bq2))


if __name__ == "__main__":
    key = jax.random.PRNGKey(0)
    k_params, k_data = jax.random.split(key)

    layers = init_critic_params(k_params)
    packed = pack_critic_params(layers)

    # batch=8: tiny single-tile path; batch=200: 2-tile "parallel" grid + padding.
    for batch in (8, 200):
        ks, ka = jax.random.split(jax.random.fold_in(k_data, batch))
        state = jax.random.normal(ks, (batch, STATE_DIM), jnp.float32)
        action = jax.random.normal(ka, (batch, ACTION_DIM), jnp.float32)

        q1, q2 = critic_forward(state, action, packed)
        jax.block_until_ready((q1, q2))

        q1_ref, q2_ref = critic_reference(state, action, layers)
        assert q1.shape == (batch, 1) and q2.shape == (batch, 1)
        # bf16 weights -> loose tolerance vs the f32 reference (deliberate).
        assert jnp.allclose(q1, q1_ref, rtol=0.1, atol=0.1), (q1, q1_ref)
        assert jnp.allclose(q2, q2_ref, rtol=0.1, atol=0.1), (q2, q2_ref)

    print("KERNEL_OK")
</pallas_src>

<mosaic_0001>
module attributes {stable_mosaic.version = 11 : i64} {
  func.func @_critic_kernel(%arg0: i32, %arg1: memref<8x7xf32, #tpu.memory_space<vmem>>, %arg2: memref<8x1xf32, #tpu.memory_space<vmem>>, %arg3: memref<7x1024xbf16, #tpu.memory_space<vmem>>, %arg4: memref<512x512xbf16, #tpu.memory_space<vmem>>, %arg5: memref<256x256xbf16, #tpu.memory_space<vmem>>, %arg6: memref<256x128xbf16, #tpu.memory_space<vmem>>, %arg7: memref<1x2944xf32, #tpu.memory_space<vmem>>, %arg8: memref<8x8xf32, #tpu.memory_space<vmem>>) attributes {dimension_semantics = [#tpu.dimension_semantics<parallel>], iteration_bounds = array<i64: 1>, scalar_prefetch = 0 : i64, scratch_operands = 0 : i64, tpu.core_type = #tpu.core_type<tc>, window_params = [{transform_indices = @transform_0, window_bounds = array<i64: 8, 7>}, {transform_indices = @transform_1, window_bounds = array<i64: 8, 1>}, {pipeline_mode = #tpu.pipeline_mode<synchronous>, transform_indices = @transform_2, window_bounds = array<i64: 7, 1024>}, {pipeline_mode = #tpu.pipeline_mode<synchronous>, transform_indices = @transform_3, window_bounds = array<i64: 512, 512>}, {pipeline_mode = #tpu.pipeline_mode<synchronous>, transform_indices = @transform_4, window_bounds = array<i64: 256, 256>}, {pipeline_mode = #tpu.pipeline_mode<synchronous>, transform_indices = @transform_5, window_bounds = array<i64: 256, 128>}, {pipeline_mode = #tpu.pipeline_mode<synchronous>, transform_indices = @transform_6, window_bounds = array<i64: 1, 2944>}, {transform_indices = @transform_7, window_bounds = array<i64: 8, 8>}]} {
    %c0 = arith.constant 0 : index
    %c0_0 = arith.constant 0 : index
    %0 = vector.load %arg7[%c0, %c0_0] : memref<1x2944xf32, #tpu.memory_space<vmem>>, vector<1x1024xf32>
    %c0_1 = arith.constant 0 : index
    %c1024 = arith.constant 1024 : index
    %1 = vector.load %arg7[%c0_1, %c1024] : memref<1x2944xf32, #tpu.memory_space<vmem>>, vector<1x1024xf32>
    %c0_2 = arith.constant 0 : index
    %c2048 = arith.constant 2048 : index
    %2 = vector.load %arg7[%c0_2, %c2048] : memref<1x2944xf32, #tpu.memory_space<vmem>>, vector<1x256xf32>
    %c0_3 = arith.constant 0 : index
    %c2304 = arith.constant 2304 : index
    %3 = vector.load %arg7[%c0_3, %c2304] : memref<1x2944xf32, #tpu.memory_space<vmem>>, vector<1x256xf32>
    %c0_4 = arith.constant 0 : index
    %c2560 = arith.constant 2560 : index
    %4 = vector.load %arg7[%c0_4, %c2560] : memref<1x2944xf32, #tpu.memory_space<vmem>>, vector<1x128xf32>
    %c0_5 = arith.constant 0 : index
    %c2688 = arith.constant 2688 : index
    %5 = vector.load %arg7[%c0_5, %c2688] : memref<1x2944xf32, #tpu.memory_space<vmem>>, vector<1x128xf32>
    %c0_6 = arith.constant 0 : index
    %c2816 = arith.constant 2816 : index
    %6 = vector.load %arg7[%c0_6, %c2816] : memref<1x2944xf32, #tpu.memory_space<vmem>>, vector<1x128xf32>
    %c0_7 = arith.constant 0 : index
    %c0_8 = arith.constant 0 : index
    %7 = vector.load %arg1[%c0_7, %c0_8] : memref<8x7xf32, #tpu.memory_space<vmem>>, vector<8x7xf32>
    %c0_9 = arith.constant 0 : index
    %c0_10 = arith.constant 0 : index
    %8 = vector.load %arg2[%c0_9, %c0_10] : memref<8x1xf32, #tpu.memory_space<vmem>>, vector<8x1xf32>
    %9 = arith.truncf %7 : vector<8x7xf32> to vector<8x7xbf16>
    %c0_11 = arith.constant 0 : index
    %c0_12 = arith.constant 0 : index
    %10 = vector.load %arg3[%c0_11, %c0_12] : memref<7x1024xbf16, #tpu.memory_space<vmem>>, vector<7x1024xbf16>
    %cst = arith.constant dense<0.000000e+00> : vector<8x1024xf32>
    %11 = tpu.matmul %9, %10, %cst {dimension_numbers = #tpu.dot_dimension_numbers<[1], [0], [0], [1], [0, 0, 1, 1], [], []>} : vector<8x7xbf16>, vector<7x1024xbf16>, vector<8x1024xf32> -> vector<8x1024xf32>
    %12 = vector.broadcast %8 : vector<8x1xf32> to vector<8x1024xf32>
    %13 = vector.broadcast %1 : vector<1x1024xf32> to vector<8x1024xf32>
    %14 = arith.mulf %12, %13 : vector<8x1024xf32>
    %15 = arith.addf %11, %14 : vector<8x1024xf32>
    %16 = vector.broadcast %0 : vector<1x1024xf32> to vector<8x1024xf32>
    %17 = arith.addf %15, %16 : vector<8x1024xf32>
    %cst_13 = arith.constant 0.000000e+00 : f32
    %18 = vector.broadcast %cst_13 : f32 to vector<8x1024xf32>
    %19 = arith.maximumf %17, %18 : vector<8x1024xf32>
    %20 = vector.extract_strided_slice %19 {offsets = [0, 0], sizes = [8, 512], strides = [1, 1]} : vector<8x1024xf32> to vector<8x512xf32>
    %21 = arith.truncf %20 : vector<8x512xf32> to vector<8x512xbf16>
    %22 = vector.extract_strided_slice %19 {offsets = [0, 512], sizes = [8, 512], strides = [1, 1]} : vector<8x1024xf32> to vector<8x512xf32>
    %23 = arith.truncf %22 : vector<8x512xf32> to vector<8x512xbf16>
    %c0_14 = arith.constant 0 : index
    %c0_15 = arith.constant 0 : index
    %24 = vector.load %arg4[%c0_14, %c0_15] : memref<512x512xbf16, #tpu.memory_space<vmem>>, vector<512x256xbf16>
    %cst_16 = arith.constant dense<0.000000e+00> : vector<8x256xf32>
    %25 = tpu.matmul %21, %24, %cst_16 {dimension_numbers = #tpu.dot_dimension_numbers<[1], [0], [0], [1], [0, 0, 1, 1], [], []>} : vector<8x512xbf16>, vector<512x256xbf16>, vector<8x256xf32> -> vector<8x256xf32>
    %26 = vector.broadcast %2 : vector<1x256xf32> to vector<8x256xf32>
    %27 = arith.addf %25, %26 : vector<8x256xf32>
    %cst_17 = arith.constant 0.000000e+00 : f32
    %28 = vector.broadcast %cst_17 : f32 to vector<8x256xf32>
    %29 = arith.maximumf %27, %28 : vector<8x256xf32>
    %30 = arith.truncf %29 : vector<8x256xf32> to vector<8x256xbf16>
    %c0_18 = arith.constant 0 : index
    %c256 = arith.constant 256 : index
    %31 = vector.load %arg4[%c0_18, %c256] : memref<512x512xbf16, #tpu.memory_space<vmem>>, vector<512x256xbf16>
    %cst_19 = arith.constant dense<0.000000e+00> : vector<8x256xf32>
    %32 = tpu.matmul %23, %31, %cst_19 {dimension_numbers = #tpu.dot_dimension_numbers<[1], [0], [0], [1], [0, 0, 1, 1], [], []>} : vector<8x512xbf16>, vector<512x256xbf16>, vector<8x256xf32> -> vector<8x256xf32>
    %33 = vector.broadcast %3 : vector<1x256xf32> to vector<8x256xf32>
    %34 = arith.addf %32, %33 : vector<8x256xf32>
    %cst_20 = arith.constant 0.000000e+00 : f32
    %35 = vector.broadcast %cst_20 : f32 to vector<8x256xf32>
    %36 = arith.maximumf %34, %35 : vector<8x256xf32>
    %37 = arith.truncf %36 : vector<8x256xf32> to vector<8x256xbf16>
    %c0_21 = arith.constant 0 : index
    %c0_22 = arith.constant 0 : index
    %38 = vector.load %arg5[%c0_21, %c0_22] : memref<256x256xbf16, #tpu.memory_space<vmem>>, vector<256x128xbf16>
    %cst_23 = arith.constant dense<0.000000e+00> : vector<8x128xf32>
    %39 = tpu.matmul %30, %38, %cst_23 {dimension_numbers = #tpu.dot_dimension_numbers<[1], [0], [0], [1], [0, 0, 1, 1], [], []>} : vector<8x256xbf16>, vector<256x128xbf16>, vector<8x128xf32> -> vector<8x128xf32>
    %40 = vector.broadcast %4 : vector<1x128xf32> to vector<8x128xf32>
    %41 = arith.addf %39, %40 : vector<8x128xf32>
    %cst_24 = arith.constant 0.000000e+00 : f32
    %42 = vector.broadcast %cst_24 : f32 to vector<8x128xf32>
    %43 = arith.maximumf %41, %42 : vector<8x128xf32>
    %44 = arith.truncf %43 : vector<8x128xf32> to vector<8x128xbf16>
    %c0_25 = arith.constant 0 : index
    %c128 = arith.constant 128 : index
    %45 = vector.load %arg5[%c0_25, %c128] : memref<256x256xbf16, #tpu.memory_space<vmem>>, vector<256x128xbf16>
    %cst_26 = arith.constant dense<0.000000e+00> : vector<8x128xf32>
    %46 = tpu.matmul %37, %45, %cst_26 {dimension_numbers = #tpu.dot_dimension_numbers<[1], [0], [0], [1], [0, 0, 1, 1], [], []>} : vector<8x256xbf16>, vector<256x128xbf16>, vector<8x128xf32> -> vector<8x128xf32>
    %47 = vector.broadcast %5 : vector<1x128xf32> to vector<8x128xf32>
    %48 = arith.addf %46, %47 : vector<8x128xf32>
    %cst_27 = arith.constant 0.000000e+00 : f32
    %49 = vector.broadcast %cst_27 : f32 to vector<8x128xf32>
    %50 = arith.maximumf %48, %49 : vector<8x128xf32>
    %51 = arith.truncf %50 : vector<8x128xf32> to vector<8x128xbf16>
    %c0_28 = arith.constant 0 : index
    %c0_29 = arith.constant 0 : index
    %52 = vector.load %arg6[%c0_28, %c0_29] : memref<256x128xbf16, #tpu.memory_space<vmem>>, vector<128x128xbf16>
    %cst_30 = arith.constant dense<0.000000e+00> : vector<8x128xf32>
    %53 = tpu.matmul %44, %52, %cst_30 {dimension_numbers = #tpu.dot_dimension_numbers<[1], [0], [0], [1], [0, 0, 1, 1], [], []>} : vector<8x128xbf16>, vector<128x128xbf16>, vector<8x128xf32> -> vector<8x128xf32>
    %c128_31 = arith.constant 128 : index
    %c0_32 = arith.constant 0 : index
    %54 = vector.load %arg6[%c128_31, %c0_32] : memref<256x128xbf16, #tpu.memory_space<vmem>>, vector<128x128xbf16>
    %cst_33 = arith.constant dense<0.000000e+00> : vector<8x128xf32>
    %55 = tpu.matmul %51, %54, %cst_33 {dimension_numbers = #tpu.dot_dimension_numbers<[1], [0], [0], [1], [0, 0, 1, 1], [], []>} : vector<8x128xbf16>, vector<128x128xbf16>, vector<8x128xf32> -> vector<8x128xf32>
    %56 = arith.addf %53, %55 : vector<8x128xf32>
    %57 = vector.broadcast %6 : vector<1x128xf32> to vector<8x128xf32>
    %58 = arith.addf %56, %57 : vector<8x128xf32>
    %59 = vector.extract_strided_slice %58 {offsets = [0, 0], sizes = [8, 8], strides = [1, 1]} : vector<8x128xf32> to vector<8x8xf32>
    %c0_34 = arith.constant 0 : index
    %c0_35 = arith.constant 0 : index
    %60 = vector.load %arg8[%c0_34, %c0_35] : memref<8x8xf32, #tpu.memory_space<vmem>>, vector<8x8xf32>
    tpu.vector_store %arg8[%c0_34, %c0_35], %59 {strides = array<i32>} : memref<8x8xf32, #tpu.memory_space<vmem>>, vector<8x8xf32>,
    return
  }
  func.func @transform_0(%arg0: i32) -> (i32, i32) {
    %c0_i32 = arith.constant 0 : i32
    %c0_i32_0 = arith.constant 0 : i32
    return %arg0, %c0_i32 : i32, i32
  }
  func.func @transform_1(%arg0: i32) -> (i32, i32) {
    %c0_i32 = arith.constant 0 : i32
    %c0_i32_0 = arith.constant 0 : i32
    return %arg0, %c0_i32 : i32, i32
  }
  func.func @transform_2(%arg0: i32) -> (i32, i32) {
    %c0_i32 = arith.constant 0 : i32
    %c0_i32_0 = arith.constant 0 : i32
    %c0_i32_1 = arith.constant 0 : i32
    return %c0_i32, %c0_i32_0 : i32, i32
  }
  func.func @transform_3(%arg0: i32) -> (i32, i32) {
    %c0_i32 = arith.constant 0 : i32
    %c0_i32_0 = arith.constant 0 : i32
    %c0_i32_1 = arith.constant 0 : i32
    return %c0_i32, %c0_i32_0 : i32, i32
  }
  func.func @transform_4(%arg0: i32) -> (i32, i32) {
    %c0_i32 = arith.constant 0 : i32
    %c0_i32_0 = arith.constant 0 : i32
    %c0_i32_1 = arith.constant 0 : i32
    return %c0_i32, %c0_i32_0 : i32, i32
  }
  func.func @transform_5(%arg0: i32) -> (i32, i32) {
    %c0_i32 = arith.constant 0 : i32
    %c0_i32_0 = arith.constant 0 : i32
    %c0_i32_1 = arith.constant 0 : i32
    return %c0_i32, %c0_i32_0 : i32, i32
  }
  func.func @transform_6(%arg0: i32) -> (i32, i32) {
    %c0_i32 = arith.constant 0 : i32
    %c0_i32_0 = arith.constant 0 : i32
    %c0_i32_1 = arith.constant 0 : i32
    return %c0_i32, %c0_i32_0 : i32, i32
  }
  func.func @transform_7(%arg0: i32) -> (i32, i32) {
    %c0_i32 = arith.constant 0 : i32
    %c0_i32_0 = arith.constant 0 : i32
    return %arg0, %c0_i32 : i32, i32
  }
}

</mosaic_0001>

<llo_original>
// kernel: tpu_custom_call.1
$region0: #{tpu_custom_call.1}
  #allocation0 [shape = 'u32[]', space=smem, size = 0x4, offset = 0x4, fixed_abs, tag = 'smem constant byte address 0x4 - core index']
  #allocation1 [shape = 'u32[144,128]{1,0:T(1,128)}', space=vmem, size = 0x12000, scoped, tag = 'internal scratch']
  %s0 = inlined_call_operand.vmem [shape: f32[8,7], index: 0, kind: input, shape index: {}]
  %s1 = inlined_call_operand.vmem [shape: f32[8,1], index: 1, kind: input, shape index: {}]
  %s2 = inlined_call_operand.hbm [shape: bf16[7,1024], index: 2, kind: input, shape index: {}]
  %s3 = inlined_call_operand.hbm [shape: bf16[512,512], index: 3, kind: input, shape index: {}]
  %s4 = inlined_call_operand.hbm [shape: bf16[256,256], index: 4, kind: input, shape index: {}]
  %s5 = inlined_call_operand.hbm [shape: bf16[256,128], index: 5, kind: input, shape index: {}]
  %s6 = inlined_call_operand.vmem [shape: f32[1,2944], index: 6, kind: input, shape index: {}]
  %s7 = inlined_call_operand.hbm [shape: f32[8,8], index: 7, kind: output, shape index: {}]
  %s8 = sld [smem:[#allocation0]]
  $region54: #{tpu_custom_call.1} parent=0
    _
  %s10 = ssub.s32 1, %s8
  %s11 = scalar_select 0, %s10, %s8
  $region1: #{tpu_custom_call.1} parent=0
    #allocation2 [shape = 'u8[16384]{0}', space=vmem, size = 0x4000, scoped, tag = 'input window, operand 2, single buffered']
    #allocation3 [shape = 's32[1]{0}', space=sflag, size = 0x4, scoped, tag = 'scoped memory for tpu_custom_call.1']
    #allocation4 [shape = 's32[1]{0}', space=sflag, size = 0x4, scoped, tag = 'scoped memory for tpu_custom_call.1']
    #allocation5 [shape = 'u8[524288]{0}', space=vmem, size = 0x80000, scoped, tag = 'input window, operand 3, single buffered']
    #allocation6 [shape = 's32[1]{0}', space=sflag, size = 0x4, scoped, tag = 'scoped memory for tpu_custom_call.1']
    #allocation7 [shape = 'u8[131072]{0}', space=vmem, size = 0x20000, scoped, tag = 'input window, operand 4, single buffered']
    #allocation8 [shape = 'u8[65536]{0}', space=vmem, size = 0x10000, scoped, tag = 'input window, operand 5, single buffered']
    #allocation9 [shape = 's32[1]{0}', space=sflag, size = 0x4, scoped, tag = 'scoped memory for tpu_custom_call.1']
    #allocation10 [shape = 'u8[4096]{0}', space=vmem, size = 0x1000, scoped, tag = 'output window, operand 0, single buffered']
    %12 = vsyncpa [#allocation3], 0
    %13 = vsyncpa [#allocation6], 0
    %14 = vsyncpa [#allocation9], 0
    %15 = vsyncpa [#allocation4], 0
    // Predicated region
    $region2: #{tpu_custom_call.1} parent=1 // pred_check
      _
    $region3: #{tpu_custom_call.1} parent=1 // pred_check_branch
      %17 = sbr.rel (0) target = $region5
    $region4: #{tpu_custom_call.1} parent=1 // pred_region
      _
    $region5: #{tpu_custom_call.1} parent=1 // pred_fallthru
      _
    // Predicated region
    $region6: #{tpu_custom_call.1} parent=1 // pred_check
      _
    $region7: #{tpu_custom_call.1} parent=1 // pred_check_branch
      %19 = sbr.rel (0) target = $region9
    $region8: #{tpu_custom_call.1} parent=1 // pred_region
      _
    $region9: #{tpu_custom_call.1} parent=1 // pred_fallthru
      _
    // Predicated region
    $region10: #{tpu_custom_call.1} parent=1 // pred_check
      _
    $region11: #{tpu_custom_call.1} parent=1 // pred_check_branch
      %21 = sbr.rel (0) target = $region13
    $region12: #{tpu_custom_call.1} parent=1 // pred_region
      %s23 = ssub.s32 512, 512
      %24 = vsyncadd [#allocation3], %s23
      %s26 = sshll.u32 [#allocation2], 4
      %s27 = int_to_ptr.vmem [resolvable:$true] %s26
      %29 = dma.hbm_to_vmem [thread:$0]  %s2, 512, %s27, [#allocation3]
    $region13: #{tpu_custom_call.1} parent=1 // pred_fallthru
      _
    // Predicated region
    $region14: #{tpu_custom_call.1} parent=1 // pred_check
      _
    $region15: #{tpu_custom_call.1} parent=1 // pred_check_branch
      %31 = sbr.rel (0) target = $region17
    $region16: #{tpu_custom_call.1} parent=1 // pred_region
      %s33 = ssub.s32 16384, 16384
      %34 = vsyncadd [#allocation6], %s33
      %s35 = sshll.u32 [#allocation5], 4
      %s36 = int_to_ptr.vmem [resolvable:$true] %s35
      %41 = dma.hbm_to_vmem [thread:$0]  %s3, 16384, %s36, [#allocation6], 256, 256, 16
    $region17: #{tpu_custom_call.1} parent=1 // pred_fallthru
      _
    // Predicated region
    $region18: #{tpu_custom_call.1} parent=1 // pred_check
      _
    $region19: #{tpu_custom_call.1} parent=1 // pred_check_branch
      %43 = sbr.rel (0) target = $region21
    $region20: #{tpu_custom_call.1} parent=1 // pred_region
      %s45 = ssub.s32 4096, 4096
      %46 = vsyncadd [#allocation6], %s45
      %s47 = sshll.u32 [#allocation7], 4
      %s48 = int_to_ptr.vmem [resolvable:$true] %s47
      %53 = dma.hbm_to_vmem [thread:$0]  %s4, 4096, %s48, [#allocation6], 128, 128, 8
    $region21: #{tpu_custom_call.1} parent=1 // pred_fallthru
      _
    // Predicated region
    $region22: #{tpu_custom_call.1} parent=1 // pred_check
      _
    $region23: #{tpu_custom_call.1} parent=1 // pred_check_branch
      %55 = sbr.rel (0) target = $region25
    $region24: #{tpu_custom_call.1} parent=1 // pred_region
      %s57 = ssub.s32 2048, 2048
      %58 = vsyncadd [#allocation9], %s57
      %s59 = sshll.u32 [#allocation8], 4
      %s60 = int_to_ptr.vmem [resolvable:$true] %s59
      %65 = dma.hbm_to_vmem [thread:$0]  %s5, 2048, %s60, [#allocation9], 64, 64, 4
    $region25: #{tpu_custom_call.1} parent=1 // pred_fallthru
      _
    // Predicated region
    $region26: #{tpu_custom_call.1} parent=1 // pred_check
      _
    $region27: #{tpu_custom_call.1} parent=1 // pred_check_branch
      %67 = sbr.rel (0) target = $region29
    $region28: #{tpu_custom_call.1} parent=1 // pred_region
      _
    $region29: #{tpu_custom_call.1} parent=1 // pred_fallthru
      _
    // Predicated region
    $region30: #{tpu_custom_call.1} parent=1 // pred_check
      _
    $region31: #{tpu_custom_call.1} parent=1 // pred_check_branch
      %69 = sbr.rel (0) target = $region33
    $region32: #{tpu_custom_call.1} parent=1 // pred_region
      %70 = dma.done [#allocation3], 512
    $region33: #{tpu_custom_call.1} parent=1 // pred_fallthru
      _
    // Predicated region
    $region34: #{tpu_custom_call.1} parent=1 // pred_check
      _
    $region35: #{tpu_custom_call.1} parent=1 // pred_check_branch
      %72 = sbr.rel (0) target = $region37
    $region36: #{tpu_custom_call.1} parent=1 // pred_region
      %73 = dma.done [#allocation6], 16384
    $region37: #{tpu_custom_call.1} parent=1 // pred_fallthru
      _
    // Predicated region
    $region38: #{tpu_custom_call.1} parent=1 // pred_check
      _
    $region39: #{tpu_custom_call.1} parent=1 // pred_check_branch
      %75 = sbr.rel (0) target = $region41
    $region40: #{tpu_custom_call.1} parent=1 // pred_region
      %76 = dma.done [#allocation6], 4096
    $region41: #{tpu_custom_call.1} parent=1 // pred_fallthru
      _
    // Predicated region
    $region42: #{tpu_custom_call.1} parent=1 // pred_check
      _
    $region43: #{tpu_custom_call.1} parent=1 // pred_check_branch
      %78 = sbr.rel (0) target = $region45
    $region44: #{tpu_custom_call.1} parent=1 // pred_region
      %79 = dma.done [#allocation9], 2048
    $region45: #{tpu_custom_call.1} parent=1 // pred_fallthru
      _
    %v81 = vld [vmem:[%s6] sm:$0xff]
    %v82 = vld [vmem:[%s6 + $0x8] sm:$0xff]
    %v83 = vld [vmem:[%s6 + $0x10] sm:$0x3]
    %v84 = vld [vmem:[%s6 + $0x12] sm:$0x3]
    %v85 = vld [vmem:[%s6 + $0x14] sm:$0x1]
    %v86 = vld [vmem:[%s6 + $0x15] sm:$0x1]
    %v87 = vld [vmem:[%s6 + $0x16] sm:$0x1]
    %v88 = vld [vmem:[%s0] sm:$0xff]
    %v89 = vld [vmem:[%s1] sm:$0xff]
    %v90 = vpack.c.bf16 %v88, %v88
    %v91 = vld [vmem:[#allocation2] sm:$0xff]
    %v92 = vld [vmem:[#allocation2 + $0x8] sm:$0xff]
    %v93 = vld [vmem:[#allocation2 + $0x10] sm:$0xff]
    %v94 = vld [vmem:[#allocation2 + $0x18] sm:$0xff]
    %96 = vset.pattern.permute.xlu0 0
    %97 = vperm.xlu0 %96, %v89
    %v98 = vpop.permute.xlu0 %97
    %v101 = vlaneseq
    %v102 = vshrl.u32 %v101, 7
    %v103 = vsub.s32 0, %v102
    %v104 = vrot.slane %v82, %v103
    %v105 = vlaneseq
    %v106 = vshrl.u32 %v105, 7
    %v107 = vsub.s32 1, %v106
    %v108 = vrot.slane %v82, %v107
    %v109 = vlaneseq
    %v110 = vshrl.u32 %v109, 7
    %v111 = vsub.s32 2, %v110
    %v112 = vrot.slane %v82, %v111
    %v113 = vlaneseq
    %v114 = vshrl.u32 %v113, 7
    %v115 = vsub.s32 3, %v114
    %v116 = vrot.slane %v82, %v115
    %v117 = vlaneseq
    %v118 = vshrl.u32 %v117, 7
    %v119 = vsub.s32 4, %v118
    %v120 = vrot.slane %v82, %v119
    %v121 = vlaneseq
    %v122 = vshrl.u32 %v121, 7
    %v123 = vsub.s32 5, %v122
    %v124 = vrot.slane %v82, %v123
    %v125 = vlaneseq
    %v126 = vshrl.u32 %v125, 7
    %v127 = vsub.s32 6, %v126
    %v128 = vrot.slane %v82, %v127
    %v129 = vlaneseq
    %v130 = vshrl.u32 %v129, 7
    %v131 = vsub.s32 7, %v130
    %v132 = vrot.slane %v82, %v131
    %v141 = vmul.f32 %v98, %v104
    %v142 = vmul.f32 %v98, %v108
    %v143 = vmul.f32 %v98, %v112
    %v144 = vmul.f32 %v98, %v116
    %v145 = vmul.f32 %v98, %v120
    %v146 = vmul.f32 %v98, %v124
    %v147 = vmul.f32 %v98, %v128
    %v148 = vmul.f32 %v98, %v132
    %v153 = vunpack.c.l.b16 %v91
    %v154 = vunpack.c.h.b16 %v91
    %v155 = vunpack.c.l.b16 %v92
    %v156 = vunpack.c.h.b16 %v92
    %v157 = vunpack.c.l.b16 %v93
    %v158 = vunpack.c.h.b16 %v93
    %v159 = vunpack.c.l.b16 %v94
    %v160 = vunpack.c.h.b16 %v94
    %v161 = vpack.c.b16 %v153, %v153
    %v162 = vpack.c.b16 %v154, %v154
    %v163 = vpack.c.b16 %v155, %v155
    %v164 = vpack.c.b16 %v156, %v156
    %v165 = vpack.c.b16 %v157, %v157
    %v166 = vpack.c.b16 %v158, %v158
    %v167 = vpack.c.b16 %v159, %v159
    %v168 = vpack.c.b16 %v160, %v160
    %vm169 = vcmask 56320
    %v171 = vsel %vm169, %v90, 0
    %vm173 = vcmask 1042432
    %vm174 = vcmask 1043456
    %v175 = vsel %vm173, 4294967295, 65535
    %v176 = vsel %vm174, %v175, 0
    %v178 = vand.u32 %v161, %v176
    %v181 = vand.u32 %v162, %v176
    %v184 = vand.u32 %v163, %v176
    %v187 = vand.u32 %v164, %v176
    %v190 = vand.u32 %v165, %v176
    %v193 = vand.u32 %v166, %v176
    %v196 = vand.u32 %v167, %v176
    %v199 = vand.u32 %v168, %v176
    %201 = vmatprep.subr.bf16.mxu0 %v181
    %202 = vmatpush1.bf16.msra.mxu0 %v178
    %203 = vmatprep.subr.bf16.mxu0 0
    %204 = vmatpush1.bf16.msra.mxu0 0
    %205 = vmatprep.subr.bf16.mxu0 0
    %206 = vmatpush1.bf16.msra.mxu0 0
    %207 = vmatprep.subr.bf16.mxu0 0
    %208 = vmatpush1.bf16.msra.mxu0 0
    %209 = vmatprep.subr.bf16.mxu0 0
    %210 = vmatpush1.bf16.msra.mxu0 0
    %211 = vmatprep.subr.bf16.mxu0 0
    %212 = vmatpush1.bf16.msra.mxu0 0
    %213 = vmatprep.subr.bf16.mxu0 0
    %214 = vmatpush1.bf16.msra.mxu0 0
    %215 = vmatprep.subr.bf16.mxu0 0
    %216 = vmatpush1.bf16.msra.mxu0 0
    %217 = vmatprep.subr.bf16.mxu0 0
    %218 = vmatpush1.bf16.msra.mxu0 0
    %219 = vmatprep.subr.bf16.mxu0 0
    %220 = vmatpush1.bf16.msra.mxu0 0
    %221 = vmatprep.subr.bf16.mxu0 0
    %222 = vmatpush1.bf16.msra.mxu0 0
    %223 = vmatprep.subr.bf16.mxu0 0
    %224 = vmatpush1.bf16.msra.mxu0 0
    %225 = vmatprep.subr.bf16.mxu0 0
    %226 = vmatpush1.bf16.msra.mxu0 0
    %227 = vmatprep.subr.bf16.mxu0 0
    %228 = vmatpush1.bf16.msra.mxu0 0
    %229 = vmatprep.subr.bf16.mxu0 0
    %230 = vmatpush1.bf16.msra.mxu0 0
    %231 = vmatprep.subr.bf16.mxu0 0
    %232 = vmatpush1.bf16.msra.mxu0 0
    %233 = vmatprep.mubr.bf16.mxu0 0
    %234 = vmatmul.mubr.bf16.gmra.mrb[0].mxu0 %v171
    %v235 = vpop.f32.mrb[0].mxu0
    %v236 = vadd.f32 %v141, %v235
    %v237 = vpop.f32.mrb[0].mxu0
    %v238 = vadd.f32 %v142, %v237
    %v239 = vpop.f32.mrb[0].mxu0
    %v240 = vpop.f32.mrb[0].mxu0
    %241 = vdwg.mxu0
    %242 = vmatprep.subr.bf16.mxu0 %v187
    %243 = vmatpush1.bf16.msra.mxu0 %v184
    %244 = vmatprep.subr.bf16.mxu0 0
    %245 = vmatpush1.bf16.msra.mxu0 0
    %246 = vmatprep.subr.bf16.mxu0 0
    %247 = vmatpush1.bf16.msra.mxu0 0
    %248 = vmatprep.subr.bf16.mxu0 0
    %249 = vmatpush1.bf16.msra.mxu0 0
    %250 = vmatprep.subr.bf16.mxu0 0
    %251 = vmatpush1.bf16.msra.mxu0 0
    %252 = vmatprep.subr.bf16.mxu0 0
    %253 = vmatpush1.bf16.msra.mxu0 0
    %254 = vmatprep.subr.bf16.mxu0 0
    %255 = vmatpush1.bf16.msra.mxu0 0
    %256 = vmatprep.subr.bf16.mxu0 0
    %257 = vmatpush1.bf16.msra.mxu0 0
    %258 = vmatprep.subr.bf16.mxu0 0
    %259 = vmatpush1.bf16.msra.mxu0 0
    %260 = vmatprep.subr.bf16.mxu0 0
    %261 = vmatpush1.bf16.msra.mxu0 0
    %262 = vmatprep.subr.bf16.mxu0 0
    %263 = vmatpush1.bf16.msra.mxu0 0
    %264 = vmatprep.subr.bf16.mxu0 0
    %265 = vmatpush1.bf16.msra.mxu0 0
    %266 = vmatprep.subr.bf16.mxu0 0
    %267 = vmatpush1.bf16.msra.mxu0 0
    %268 = vmatprep.subr.bf16.mxu0 0
    %269 = vmatpush1.bf16.msra.mxu0 0
    %270 = vmatprep.subr.bf16.mxu0 0
    %271 = vmatpush1.bf16.msra.mxu0 0
    %272 = vmatprep.subr.bf16.mxu0 0
    %273 = vmatpush1.bf16.msra.mxu0 0
    %274 = vmatprep.mubr.bf16.mxu0 0
    %275 = vmatmul.mubr.bf16.gmra.mrb[0].mxu0 %v171
    %v276 = vpop.f32.mrb[0].mxu0
    %v277 = vadd.f32 %v143, %v276
    %v278 = vpop.f32.mrb[0].mxu0
    %v279 = vadd.f32 %v144, %v278
    %v280 = vpop.f32.mrb[0].mxu0
    %v281 = vpop.f32.mrb[0].mxu0
    %282 = vdwg.mxu0
    %283 = vmatprep.subr.bf16.mxu0 %v193
    %284 = vmatpush1.bf16.msra.mxu0 %v190
    %285 = vmatprep.subr.bf16.mxu0 0
    %286 = vmatpush1.bf16.msra.mxu0 0
    %287 = vmatprep.subr.bf16.mxu0 0
    %288 = vmatpush1.bf16.msra.mxu0 0
    %289 = vmatprep.subr.bf16.mxu0 0
    %290 = vmatpush1.bf16.msra.mxu0 0
    %291 = vmatprep.subr.bf16.mxu0 0
    %292 = vmatpush1.bf16.msra.mxu0 0
    %293 = vmatprep.subr.bf16.mxu0 0
    %294 = vmatpush1.bf16.msra.mxu0 0
    %295 = vmatprep.subr.bf16.mxu0 0
    %296 = vmatpush1.bf16.msra.mxu0 0
    %297 = vmatprep.subr.bf16.mxu0 0
    %298 = vmatpush1.bf16.msra.mxu0 0
    %299 = vmatprep.subr.bf16.mxu0 0
    %300 = vmatpush1.bf16.msra.mxu0 0
    %301 = vmatprep.subr.bf16.mxu0 0
    %302 = vmatpush1.bf16.msra.mxu0 0
    %303 = vmatprep.subr.bf16.mxu0 0
    %304 = vmatpush1.bf16.msra.mxu0 0
    %305 = vmatprep.subr.bf16.mxu0 0
    %306 = vmatpush1.bf16.msra.mxu0 0
    %307 = vmatprep.subr.bf16.mxu0 0
    %308 = vmatpush1.bf16.msra.mxu0 0
    %309 = vmatprep.subr.bf16.mxu0 0
    %310 = vmatpush1.bf16.msra.mxu0 0
    %311 = vmatprep.subr.bf16.mxu0 0
    %312 = vmatpush1.bf16.msra.mxu0 0
    %313 = vmatprep.subr.bf16.mxu0 0
    %314 = vmatpush1.bf16.msra.mxu0 0
    %315 = vmatprep.mubr.bf16.mxu0 0
    %316 = vmatmul.mubr.bf16.gmra.mrb[0].mxu0 %v171
    %v317 = vpop.f32.mrb[0].mxu0
    %v318 = vadd.f32 %v145, %v317
    %v319 = vpop.f32.mrb[0].mxu0
    %v320 = vadd.f32 %v146, %v319
    %v321 = vpop.f32.mrb[0].mxu0
    %v322 = vpop.f32.mrb[0].mxu0
    %323 = vdwg.mxu0
    %324 = vmatprep.subr.bf16.mxu0 %v199
    %325 = vmatpush1.bf16.msra.mxu0 %v196
    %326 = vmatprep.subr.bf16.mxu0 0
    %327 = vmatpush1.bf16.msra.mxu0 0
    %328 = vmatprep.subr.bf16.mxu0 0
    %329 = vmatpush1.bf16.msra.mxu0 0
    %330 = vmatprep.subr.bf16.mxu0 0
    %331 = vmatpush1.bf16.msra.mxu0 0
    %332 = vmatprep.subr.bf16.mxu0 0
    %333 = vmatpush1.bf16.msra.mxu0 0
    %334 = vmatprep.subr.bf16.mxu0 0
    %335 = vmatpush1.bf16.msra.mxu0 0
    %336 = vmatprep.subr.bf16.mxu0 0
    %337 = vmatpush1.bf16.msra.mxu0 0
    %338 = vmatprep.subr.bf16.mxu0 0
    %339 = vmatpush1.bf16.msra.mxu0 0
    %340 = vmatprep.subr.bf16.mxu0 0
    %341 = vmatpush1.bf16.msra.mxu0 0
    %342 = vmatprep.subr.bf16.mxu0 0
    %343 = vmatpush1.bf16.msra.mxu0 0
    %344 = vmatprep.subr.bf16.mxu0 0
    %345 = vmatpush1.bf16.msra.mxu0 0
    %346 = vmatprep.subr.bf16.mxu0 0
    %347 = vmatpush1.bf16.msra.mxu0 0
    %348 = vmatprep.subr.bf16.mxu0 0
    %349 = vmatpush1.bf16.msra.mxu0 0
    %350 = vmatprep.subr.bf16.mxu0 0
    %351 = vmatpush1.bf16.msra.mxu0 0
    %352 = vmatprep.subr.bf16.mxu0 0
    %353 = vmatpush1.bf16.msra.mxu0 0
    %354 = vmatprep.subr.bf16.mxu0 0
    %355 = vmatpush1.bf16.msra.mxu0 0
    %356 = vmatprep.mubr.bf16.mxu0 0
    %357 = vmatmul.mubr.bf16.gmra.mrb[0].mxu0 %v171
    %v358 = vpop.f32.mrb[0].mxu0
    %v359 = vadd.f32 %v147, %v358
    %v360 = vpop.f32.mrb[0].mxu0
    %v361 = vadd.f32 %v148, %v360
    %v362 = vpop.f32.mrb[0].mxu0
    %v363 = vpop.f32.mrb[0].mxu0
    %364 = vdwg.mxu0
    %v366 = vlaneseq
    %v367 = vshrl.u32 %v366, 7
    %v368 = vsub.s32 0, %v367
    %v369 = vrot.slane %v81, %v368
    %v370 = vlaneseq
    %v371 = vshrl.u32 %v370, 7
    %v372 = vsub.s32 1, %v371
    %v373 = vrot.slane %v81, %v372
    %v374 = vlaneseq
    %v375 = vshrl.u32 %v374, 7
    %v376 = vsub.s32 2, %v375
    %v377 = vrot.slane %v81, %v376
    %v378 = vlaneseq
    %v379 = vshrl.u32 %v378, 7
    %v380 = vsub.s32 3, %v379
    %v381 = vrot.slane %v81, %v380
    %v382 = vlaneseq
    %v383 = vshrl.u32 %v382, 7
    %v384 = vsub.s32 4, %v383
    %v385 = vrot.slane %v81, %v384
    %v386 = vlaneseq
    %v387 = vshrl.u32 %v386, 7
    %v388 = vsub.s32 5, %v387
    %v389 = vrot.slane %v81, %v388
    %v390 = vlaneseq
    %v391 = vshrl.u32 %v390, 7
    %v392 = vsub.s32 6, %v391
    %v393 = vrot.slane %v81, %v392
    %v394 = vlaneseq
    %v395 = vshrl.u32 %v394, 7
    %v396 = vsub.s32 7, %v395
    %v397 = vrot.slane %v81, %v396
    %v406 = vadd.f32 %v236, %v369
    %v407 = vadd.f32 %v238, %v373
    %v408 = vadd.f32 %v277, %v377
    %v409 = vadd.f32 %v279, %v381
    %v410 = vadd.f32 %v318, %v385
    %v411 = vadd.f32 %v320, %v389
    %v412 = vadd.f32 %v359, %v393
    %v413 = vadd.f32 %v361, %v397
    %v414 = vmax.f32 %v406, 0.0
    %v415 = vmax.f32 %v407, 0.0
    %v416 = vmax.f32 %v408, 0.0
    %v417 = vmax.f32 %v409, 0.0
    %v418 = vmax.f32 %v410, 0.0
    %v419 = vmax.f32 %v411, 0.0
    %v420 = vmax.f32 %v412, 0.0
    %v421 = vmax.f32 %v413, 0.0
    %v422 = vpack.c.bf16 %v414, %v414
    %v423 = vpack.c.bf16 %v415, %v415
    %v424 = vpack.c.bf16 %v416, %v416
    %v425 = vpack.c.bf16 %v417, %v417
    %v426 = vpack.c.bf16 %v418, %v418
    %v427 = vpack.c.bf16 %v419, %v419
    %v428 = vpack.c.bf16 %v420, %v420
    %v429 = vpack.c.bf16 %v421, %v421
    %v430 = vld [vmem:[#allocation5] sm:$0xff]
    %v431 = vld [vmem:[#allocation5 + $0x10] sm:$0xff]
    %v432 = vld [vmem:[#allocation5 + $0x20] sm:$0xff]
    %v433 = vld [vmem:[#allocation5 + $0x30] sm:$0xff]
    %v434 = vld [vmem:[#allocation5 + $0x40] sm:$0xff]
    %v435 = vld [vmem:[#allocation5 + $0x50] sm:$0xff]
    %v436 = vld [vmem:[#allocation5 + $0x60] sm:$0xff]
    %v437 = vld [vmem:[#allocation5 + $0x70] sm:$0xff]
    %v438 = vld [vmem:[#allocation5 + $0x80] sm:$0xff]
    %v439 = vld [vmem:[#allocation5 + $0x90] sm:$0xff]
    %v440 = vld [vmem:[#allocation5 + $0xa0] sm:$0xff]
    %v441 = vld [vmem:[#allocation5 + $0xb0] sm:$0xff]
    %v442 = vld [vmem:[#allocation5 + $0xc0] sm:$0xff]
    %v443 = vld [vmem:[#allocation5 + $0xd0] sm:$0xff]
    %v444 = vld [vmem:[#allocation5 + $0xe0] sm:$0xff]
    %v445 = vld [vmem:[#allocation5 + $0xf0] sm:$0xff]
    %v446 = vld [vmem:[#allocation5 + $0x100] sm:$0xff]
    %v447 = vld [vmem:[#allocation5 + $0x110] sm:$0xff]
    %v448 = vld [vmem:[#allocation5 + $0x120] sm:$0xff]
    %v449 = vld [vmem:[#allocation5 + $0x130] sm:$0xff]
    %v450 = vld [vmem:[#allocation5 + $0x140] sm:$0xff]
    %v451 = vld [vmem:[#allocation5 + $0x150] sm:$0xff]
    %v452 = vld [vmem:[#allocation5 + $0x160] sm:$0xff]
    %v453 = vld [vmem:[#allocation5 + $0x170] sm:$0xff]
    %v454 = vld [vmem:[#allocation5 + $0x180] sm:$0xff]
    %v455 = vld [vmem:[#allocation5 + $0x190] sm:$0xff]
    %v456 = vld [vmem:[#allocation5 + $0x1a0] sm:$0xff]
    %v457 = vld [vmem:[#allocation5 + $0x1b0] sm:$0xff]
    %v458 = vld [vmem:[#allocation5 + $0x1c0] sm:$0xff]
    %v459 = vld [vmem:[#allocation5 + $0x1d0] sm:$0xff]
    %v460 = vld [vmem:[#allocation5 + $0x1e0] sm:$0xff]
    %v461 = vld [vmem:[#allocation5 + $0x1f0] sm:$0xff]
    %v462 = vld [vmem:[#allocation5 + $0x200] sm:$0xff]
    %v463 = vld [vmem:[#allocation5 + $0x210] sm:$0xff]
    %v464 = vld [vmem:[#allocation5 + $0x220] sm:$0xff]
    %v465 = vld [vmem:[#allocation5 + $0x230] sm:$0xff]
    %v466 = vld [vmem:[#allocation5 + $0x240] sm:$0xff]
    %v467 = vld [vmem:[#allocation5 + $0x250] sm:$0xff]
    %v468 = vld [vmem:[#allocation5 + $0x260] sm:$0xff]
    %v469 = vld [vmem:[#allocation5 + $0x270] sm:$0xff]
    %v470 = vld [vmem:[#allocation5 + $0x280] sm:$0xff]
    %v471 = vld [vmem:[#allocation5 + $0x290] sm:$0xff]
    %v472 = vld [vmem:[#allocation5 + $0x2a0] sm:$0xff]
    %v473 = vld [vmem:[#allocation5 + $0x2b0] sm:$0xff]
    %v474 = vld [vmem:[#allocation5 + $0x2c0] sm:$0xff]
    %v475 = vld [vmem:[#allocation5 + $0x2d0] sm:$0xff]
    %v476 = vld [vmem:[#allocation5 + $0x2e0] sm:$0xff]
    %v477 = vld [vmem:[#allocation5 + $0x2f0] sm:$0xff]
    %v478 = vld [vmem:[#allocation5 + $0x300] sm:$0xff]
    %v479 = vld [vmem:[#allocation5 + $0x310] sm:$0xff]
    %v480 = vld [vmem:[#allocation5 + $0x320] sm:$0xff]
    %v481 = vld [vmem:[#allocation5 + $0x330] sm:$0xff]
    %v482 = vld [vmem:[#allocation5 + $0x340] sm:$0xff]
    %v483 = vld [vmem:[#allocation5 + $0x350] sm:$0xff]
    %v484 = vld [vmem:[#allocation5 + $0x360] sm:$0xff]
    %v485 = vld [vmem:[#allocation5 + $0x370] sm:$0xff]
    %v486 = vld [vmem:[#allocation5 + $0x380] sm:$0xff]
    %v487 = vld [vmem:[#allocation5 + $0x390] sm:$0xff]
    %v488 = vld [vmem:[#allocation5 + $0x3a0] sm:$0xff]
    %v489 = vld [vmem:[#allocation5 + $0x3b0] sm:$0xff]
    %v490 = vld [vmem:[#allocation5 + $0x3c0] sm:$0xff]
    %v491 = vld [vmem:[#allocation5 + $0x3d0] sm:$0xff]
    %v492 = vld [vmem:[#allocation5 + $0x3e0] sm:$0xff]
    %v493 = vld [vmem:[#allocation5 + $0x3f0] sm:$0xff]
    %v495 = vlaneseq
    %v496 = vshrl.u32 %v495, 7
    %v497 = vsub.s32 0, %v496
    %v498 = vrot.slane %v83, %v497
    %v499 = vlaneseq
    %v500 = vshrl.u32 %v499, 7
    %v501 = vsub.s32 1, %v500
    %v502 = vrot.slane %v83, %v501
    %v569 = vunpack.c.l.b16 %v430
    %v570 = vunpack.c.h.b16 %v430
    %v571 = vunpack.c.l.b16 %v431
    %v572 = vunpack.c.h.b16 %v431
    %v573 = vunpack.c.l.b16 %v432
    %v574 = vunpack.c.h.b16 %v432
    %v575 = vunpack.c.l.b16 %v433
    %v576 = vunpack.c.h.b16 %v433
    %v577 = vunpack.c.l.b16 %v434
    %v578 = vunpack.c.h.b16 %v434
    %v579 = vunpack.c.l.b16 %v435
    %v580 = vunpack.c.h.b16 %v435
    %v581 = vunpack.c.l.b16 %v436
    %v582 = vunpack.c.h.b16 %v436
    %v583 = vunpack.c.l.b16 %v437
    %v584 = vunpack.c.h.b16 %v437
    %v585 = vunpack.c.l.b16 %v438
    %v586 = vunpack.c.h.b16 %v438
    %v587 = vunpack.c.l.b16 %v439
    %v588 = vunpack.c.h.b16 %v439
    %v589 = vunpack.c.l.b16 %v440
    %v590 = vunpack.c.h.b16 %v440
    %v591 = vunpack.c.l.b16 %v441
    %v592 = vunpack.c.h.b16 %v441
    %v593 = vunpack.c.l.b16 %v442
    %v594 = vunpack.c.h.b16 %v442
    %v595 = vunpack.c.l.b16 %v443
    %v596 = vunpack.c.h.b16 %v443
    %v597 = vunpack.c.l.b16 %v444
    %v598 = vunpack.c.h.b16 %v444
    %v599 = vunpack.c.l.b16 %v445
    %v600 = vunpack.c.h.b16 %v445
    %v601 = vunpack.c.l.b16 %v446
    %v602 = vunpack.c.h.b16 %v446
    %v603 = vunpack.c.l.b16 %v447
    %v604 = vunpack.c.h.b16 %v447
    %v605 = vunpack.c.l.b16 %v448
    %v606 = vunpack.c.h.b16 %v448
    %v607 = vunpack.c.l.b16 %v449
    %v608 = vunpack.c.h.b16 %v449
    %v609 = vunpack.c.l.b16 %v450
    %v610 = vunpack.c.h.b16 %v450
    %v611 = vunpack.c.l.b16 %v451
    %v612 = vunpack.c.h.b16 %v451
    %v613 = vunpack.c.l.b16 %v452
    %v614 = vunpack.c.h.b16 %v452
    %v615 = vunpack.c.l.b16 %v453
    %v616 = vunpack.c.h.b16 %v453
    %v617 = vunpack.c.l.b16 %v454
    %v618 = vunpack.c.h.b16 %v454
    %v619 = vunpack.c.l.b16 %v455
    %v620 = vunpack.c.h.b16 %v455
    %v621 = vunpack.c.l.b16 %v456
    %v622 = vunpack.c.h.b16 %v456
    %v623 = vunpack.c.l.b16 %v457
    %v624 = vunpack.c.h.b16 %v457
    %v625 = vunpack.c.l.b16 %v458
    %v626 = vunpack.c.h.b16 %v458
    %v627 = vunpack.c.l.b16 %v459
    %v628 = vunpack.c.h.b16 %v459
    %v629 = vunpack.c.l.b16 %v460
    %v630 = vunpack.c.h.b16 %v460
    %v631 = vunpack.c.l.b16 %v461
    %v632 = vunpack.c.h.b16 %v461
    %v633 = vunpack.c.l.b16 %v462
    %v634 = vunpack.c.h.b16 %v462
    %v635 = vunpack.c.l.b16 %v463
    %v636 = vunpack.c.h.b16 %v463
    %v637 = vunpack.c.l.b16 %v464
    %v638 = vunpack.c.h.b16 %v464
    %v639 = vunpack.c.l.b16 %v465
    %v640 = vunpack.c.h.b16 %v465
    %v641 = vunpack.c.l.b16 %v466
    %v642 = vunpack.c.h.b16 %v466
    %v643 = vunpack.c.l.b16 %v467
    %v644 = vunpack.c.h.b16 %v467
    %v645 = vunpack.c.l.b16 %v468
    %v646 = vunpack.c.h.b16 %v468
    %v647 = vunpack.c.l.b16 %v469
    %v648 = vunpack.c.h.b16 %v469
    %v649 = vunpack.c.l.b16 %v470
    %v650 = vunpack.c.h.b16 %v470
    %v651 = vunpack.c.l.b16 %v471
    %v652 = vunpack.c.h.b16 %v471
    %v653 = vunpack.c.l.b16 %v472
    %v654 = vunpack.c.h.b16 %v472
    %v655 = vunpack.c.l.b16 %v473
    %v656 = vunpack.c.h.b16 %v473
    %v657 = vunpack.c.l.b16 %v474
    %v658 = vunpack.c.h.b16 %v474
    %v659 = vunpack.c.l.b16 %v475
    %v660 = vunpack.c.h.b16 %v475
    %v661 = vunpack.c.l.b16 %v476
    %v662 = vunpack.c.h.b16 %v476
    %v663 = vunpack.c.l.b16 %v477
    %v664 = vunpack.c.h.b16 %v477
    %v665 = vunpack.c.l.b16 %v478
    %v666 = vunpack.c.h.b16 %v478
    %v667 = vunpack.c.l.b16 %v479
    %v668 = vunpack.c.h.b16 %v479
    %v669 = vunpack.c.l.b16 %v480
    %v670 = vunpack.c.h.b16 %v480
    %v671 = vunpack.c.l.b16 %v481
    %v672 = vunpack.c.h.b16 %v481
    %v673 = vunpack.c.l.b16 %v482
    %v674 = vunpack.c.h.b16 %v482
    %v675 = vunpack.c.l.b16 %v483
    %v676 = vunpack.c.h.b16 %v483
    %v677 = vunpack.c.l.b16 %v484
    %v678 = vunpack.c.h.b16 %v484
    %v679 = vunpack.c.l.b16 %v485
    %v680 = vunpack.c.h.b16 %v485
    %v681 = vunpack.c.l.b16 %v486
    %v682 = vunpack.c.h.b16 %v486
    %v683 = vunpack.c.l.b16 %v487
    %v684 = vunpack.c.h.b16 %v487
    %v685 = vunpack.c.l.b16 %v488
    %v686 = vunpack.c.h.b16 %v488
    %v687 = vunpack.c.l.b16 %v489
    %v688 = vunpack.c.h.b16 %v489
    %v689 = vunpack.c.l.b16 %v490
    %v690 = vunpack.c.h.b16 %v490
    %v691 = vunpack.c.l.b16 %v491
    %v692 = vunpack.c.h.b16 %v491
    %v693 = vunpack.c.l.b16 %v492
    %v694 = vunpack.c.h.b16 %v492
    %v695 = vunpack.c.l.b16 %v493
    %v696 = vunpack.c.h.b16 %v493
    %v697 = vpack.c.b16 %v571, %v569
    %v698 = vpack.c.b16 %v572, %v570
    %v699 = vpack.c.b16 %v575, %v573
    %v700 = vpack.c.b16 %v576, %v574
    %v701 = vpack.c.b16 %v579, %v577
    %v702 = vpack.c.b16 %v580, %v578
    %v703 = vpack.c.b16 %v583, %v581
    %v704 = vpack.c.b16 %v584, %v582
    %v705 = vpack.c.b16 %v587, %v585
    %v706 = vpack.c.b16 %v588, %v586
    %v707 = vpack.c.b16 %v591, %v589
    %v708 = vpack.c.b16 %v592, %v590
    %v709 = vpack.c.b16 %v595, %v593
    %v710 = vpack.c.b16 %v596, %v594
    %v711 = vpack.c.b16 %v599, %v597
    %v712 = vpack.c.b16 %v600, %v598
    %v713 = vpack.c.b16 %v603, %v601
    %v714 = vpack.c.b16 %v604, %v602
    %v715 = vpack.c.b16 %v607, %v605
    %v716 = vpack.c.b16 %v608, %v606
    %v717 = vpack.c.b16 %v611, %v609
    %v718 = vpack.c.b16 %v612, %v610
    %v719 = vpack.c.b16 %v615, %v613
    %v720 = vpack.c.b16 %v616, %v614
    %v721 = vpack.c.b16 %v619, %v617
    %v722 = vpack.c.b16 %v620, %v618
    %v723 = vpack.c.b16 %v623, %v621
    %v724 = vpack.c.b16 %v624, %v622
    %v725 = vpack.c.b16 %v627, %v625
    %v726 = vpack.c.b16 %v628, %v626
    %v727 = vpack.c.b16 %v631, %v629
    %v728 = vpack.c.b16 %v632, %v630
    %v729 = vpack.c.b16 %v635, %v633
    %v730 = vpack.c.b16 %v636, %v634
    %v731 = vpack.c.b16 %v639, %v637
    %v732 = vpack.c.b16 %v640, %v638
    %v733 = vpack.c.b16 %v643, %v641
    %v734 = vpack.c.b16 %v644, %v642
    %v735 = vpack.c.b16 %v647, %v645
    %v736 = vpack.c.b16 %v648, %v646
    %v737 = vpack.c.b16 %v651, %v649
    %v738 = vpack.c.b16 %v652, %v650
    %v739 = vpack.c.b16 %v655, %v653
    %v740 = vpack.c.b16 %v656, %v654
    %v741 = vpack.c.b16 %v659, %v657
    %v742 = vpack.c.b16 %v660, %v658
    %v743 = vpack.c.b16 %v663, %v661
    %v744 = vpack.c.b16 %v664, %v662
    %v745 = vpack.c.b16 %v667, %v665
    %v746 = vpack.c.b16 %v668, %v666
    %v747 = vpack.c.b16 %v671, %v669
    %v748 = vpack.c.b16 %v672, %v670
    %v749 = vpack.c.b16 %v675, %v673
    %v750 = vpack.c.b16 %v676, %v674
    %v751 = vpack.c.b16 %v679, %v677
    %v752 = vpack.c.b16 %v680, %v678
    %v753 = vpack.c.b16 %v683, %v681
    %v754 = vpack.c.b16 %v684, %v682
    %v755 = vpack.c.b16 %v687, %v685
    %v756 = vpack.c.b16 %v688, %v686
    %v757 = vpack.c.b16 %v691, %v689
    %v758 = vpack.c.b16 %v692, %v690
    %v759 = vpack.c.b16 %v695, %v693
    %v760 = vpack.c.b16 %v696, %v694
    %825 = vmatprep.subr.bf16.mxu0 %v698
    %826 = vmatpush1.bf16.msra.mxu0 %v697
    %827 = vmatprep.subr.bf16.mxu0 %v700
    %828 = vmatpush1.bf16.msra.mxu0 %v699
    %829 = vmatprep.subr.bf16.mxu0 %v702
    %830 = vmatpush1.bf16.msra.mxu0 %v701
    %831 = vmatprep.subr.bf16.mxu0 %v704
    %832 = vmatpush1.bf16.msra.mxu0 %v703
    %833 = vmatprep.subr.bf16.mxu0 %v706
    %834 = vmatpush1.bf16.msra.mxu0 %v705
    %835 = vmatprep.subr.bf16.mxu0 %v708
    %836 = vmatpush1.bf16.msra.mxu0 %v707
    %837 = vmatprep.subr.bf16.mxu0 %v710
    %838 = vmatpush1.bf16.msra.mxu0 %v709
    %839 = vmatprep.subr.bf16.mxu0 %v712
    %840 = vmatpush1.bf16.msra.mxu0 %v711
    %841 = vmatprep.subr.bf16.mxu0 %v714
    %842 = vmatpush1.bf16.msra.mxu0 %v713
    %843 = vmatprep.subr.bf16.mxu0 %v716
    %844 = vmatpush1.bf16.msra.mxu0 %v715
    %845 = vmatprep.subr.bf16.mxu0 %v718
    %846 = vmatpush1.bf16.msra.mxu0 %v717
    %847 = vmatprep.subr.bf16.mxu0 %v720
    %848 = vmatpush1.bf16.msra.mxu0 %v719
    %849 = vmatprep.subr.bf16.mxu0 %v722
    %850 = vmatpush1.bf16.msra.mxu0 %v721
    %851 = vmatprep.subr.bf16.mxu0 %v724
    %852 = vmatpush1.bf16.msra.mxu0 %v723
    %853 = vmatprep.subr.bf16.mxu0 %v726
    %854 = vmatpush1.bf16.msra.mxu0 %v725
    %855 = vmatprep.subr.bf16.mxu0 %v728
    %856 = vmatpush1.bf16.msra.mxu0 %v727
    %857 = vmatprep.mubr.bf16.mxu0 %v423
    %858 = vmatmul.mubr.bf16.gmra.mrb[0].mxu0 %v422
    %v859 = vpop.f32.mrb[0].mxu0
    %v860 = vadd.f32 %v498, %v859
    %v861 = vpop.f32.mrb[0].mxu0
    %v862 = vadd.f32 %v502, %v861
    %v863 = vpop.f32.mrb[0].mxu0
    %v864 = vpop.f32.mrb[0].mxu0
    %865 = vdwg.mxu0
    %866 = vmatprep.subr.bf16.mxu0 %v730
    %867 = vmatpush1.bf16.msra.mxu0 %v729
    %868 = vmatprep.subr.bf16.mxu0 %v732
    %869 = vmatpush1.bf16.msra.mxu0 %v731
    %870 = vmatprep.subr.bf16.mxu0 %v734
    %871 = vmatpush1.bf16.msra.mxu0 %v733
    %872 = vmatprep.subr.bf16.mxu0 %v736
    %873 = vmatpush1.bf16.msra.mxu0 %v735
    %874 = vmatprep.subr.bf16.mxu0 %v738
    %875 = vmatpush1.bf16.msra.mxu0 %v737
    %876 = vmatprep.subr.bf16.mxu0 %v740
    %877 = vmatpush1.bf16.msra.mxu0 %v739
    %878 = vmatprep.subr.bf16.mxu0 %v742
    %879 = vmatpush1.bf16.msra.mxu0 %v741
    %880 = vmatprep.subr.bf16.mxu0 %v744
    %881 = vmatpush1.bf16.msra.mxu0 %v743
    %882 = vmatprep.subr.bf16.mxu0 %v746
    %883 = vmatpush1.bf16.msra.mxu0 %v745
    %884 = vmatprep.subr.bf16.mxu0 %v748
    %885 = vmatpush1.bf16.msra.mxu0 %v747
    %886 = vmatprep.subr.bf16.mxu0 %v750
    %887 = vmatpush1.bf16.msra.mxu0 %v749
    %888 = vmatprep.subr.bf16.mxu0 %v752
    %889 = vmatpush1.bf16.msra.mxu0 %v751
    %890 = vmatprep.subr.bf16.mxu0 %v754
    %891 = vmatpush1.bf16.msra.mxu0 %v753
    %892 = vmatprep.subr.bf16.mxu0 %v756
    %893 = vmatpush1.bf16.msra.mxu0 %v755
    %894 = vmatprep.subr.bf16.mxu0 %v758
    %895 = vmatpush1.bf16.msra.mxu0 %v757
    %896 = vmatprep.subr.bf16.mxu0 %v760
    %897 = vmatpush1.bf16.msra.mxu0 %v759
    %898 = vmatprep.mubr.bf16.mxu0 %v425
    %899 = vmatmul.mubr.bf16.gmra.mrb[0].mxu0 %v424
    %v900 = vpop.f32.mrb[0].mxu0
    %v901 = vadd.f32 %v860, %v900
    %v902 = vpop.f32.mrb[0].mxu0
    %v903 = vadd.f32 %v862, %v902
    %v904 = vpop.f32.mrb[0].mxu0
    %v905 = vpop.f32.mrb[0].mxu0
    %906 = vdwg.mxu0
    %v907 = vmax.f32 %v901, 0.0
    %v908 = vmax.f32 %v903, 0.0
    %v909 = vpack.c.bf16 %v907, %v907
    %v910 = vpack.c.bf16 %v908, %v908
    %v911 = vld [vmem:[#allocation5 + $0x8] sm:$0xff]
    %v912 = vld [vmem:[#allocation5 + $0x18] sm:$0xff]
    %v913 = vld [vmem:[#allocation5 + $0x28] sm:$0xff]
    %v914 = vld [vmem:[#allocation5 + $0x38] sm:$0xff]
    %v915 = vld [vmem:[#allocation5 + $0x48] sm:$0xff]
    %v916 = vld [vmem:[#allocation5 + $0x58] sm:$0xff]
    %v917 = vld [vmem:[#allocation5 + $0x68] sm:$0xff]
    %v918 = vld [vmem:[#allocation5 + $0x78] sm:$0xff]
    %v919 = vld [vmem:[#allocation5 + $0x88] sm:$0xff]
    %v920 = vld [vmem:[#allocation5 + $0x98] sm:$0xff]
    %v921 = vld [vmem:[#allocation5 + $0xa8] sm:$0xff]
    %v922 = vld [vmem:[#allocation5 + $0xb8] sm:$0xff]
    %v923 = vld [vmem:[#allocation5 + $0xc8] sm:$0xff]
    %v924 = vld [vmem:[#allocation5 + $0xd8] sm:$0xff]
    %v925 = vld [vmem:[#allocation5 + $0xe8] sm:$0xff]
    %v926 = vld [vmem:[#allocation5 + $0xf8] sm:$0xff]
    %v927 = vld [vmem:[#allocation5 + $0x108] sm:$0xff]
    %v928 = vld [vmem:[#allocation5 + $0x118] sm:$0xff]
    %v929 = vld [vmem:[#allocation5 + $0x128] sm:$0xff]
    %v930 = vld [vmem:[#allocation5 + $0x138] sm:$0xff]
    %v931 = vld [vmem:[#allocation5 + $0x148] sm:$0xff]
    %v932 = vld [vmem:[#allocation5 + $0x158] sm:$0xff]
    %v933 = vld [vmem:[#allocation5 + $0x168] sm:$0xff]
    %v934 = vld [vmem:[#allocation5 + $0x178] sm:$0xff]
    %v935 = vld [vmem:[#allocation5 + $0x188] sm:$0xff]
    %v936 = vld [vmem:[#allocation5 + $0x198] sm:$0xff]
    %v937 = vld [vmem:[#allocation5 + $0x1a8] sm:$0xff]
    %v938 = vld [vmem:[#allocation5 + $0x1b8] sm:$0xff]
    %v939 = vld [vmem:[#allocation5 + $0x1c8] sm:$0xff]
    %v940 = vld [vmem:[#allocation5 + $0x1d8] sm:$0xff]
    %v941 = vld [vmem:[#allocation5 + $0x1e8] sm:$0xff]
    %v942 = vld [vmem:[#allocation5 + $0x1f8] sm:$0xff]
    %v943 = vld [vmem:[#allocation5 + $0x208] sm:$0xff]
    %v944 = vld [vmem:[#allocation5 + $0x218] sm:$0xff]
    %v945 = vld [vmem:[#allocation5 + $0x228] sm:$0xff]
    %v946 = vld [vmem:[#allocation5 + $0x238] sm:$0xff]
    %v947 = vld [vmem:[#allocation5 + $0x248] sm:$0xff]
    %v948 = vld [vmem:[#allocation5 + $0x258] sm:$0xff]
    %v949 = vld [vmem:[#allocation5 + $0x268] sm:$0xff]
    %v950 = vld [vmem:[#allocation5 + $0x278] sm:$0xff]
    %v951 = vld [vmem:[#allocation5 + $0x288] sm:$0xff]
    %v952 = vld [vmem:[#allocation5 + $0x298] sm:$0xff]
    %v953 = vld [vmem:[#allocation5 + $0x2a8] sm:$0xff]
    %v954 = vld [vmem:[#allocation5 + $0x2b8] sm:$0xff]
    %v955 = vld [vmem:[#allocation5 + $0x2c8] sm:$0xff]
    %v956 = vld [vmem:[#allocation5 + $0x2d8] sm:$0xff]
    %v957 = vld [vmem:[#allocation5 + $0x2e8] sm:$0xff]
    %v958 = vld [vmem:[#allocation5 + $0x2f8] sm:$0xff]
    %v959 = vld [vmem:[#allocation5 + $0x308] sm:$0xff]
    %v960 = vld [vmem:[#allocation5 + $0x318] sm:$0xff]
    %v961 = vld [vmem:[#allocation5 + $0x328] sm:$0xff]
    %v962 = vld [vmem:[#allocation5 + $0x338] sm:$0xff]
    %v963 = vld [vmem:[#allocation5 + $0x348] sm:$0xff]
    %v964 = vld [vmem:[#allocation5 + $0x358] sm:$0xff]
    %v965 = vld [vmem:[#allocation5 + $0x368] sm:$0xff]
    %v966 = vld [vmem:[#allocation5 + $0x378] sm:$0xff]
    %v967 = vld [vmem:[#allocation5 + $0x388] sm:$0xff]
    %v968 = vld [vmem:[#allocation5 + $0x398] sm:$0xff]
    %v969 = vld [vmem:[#allocation5 + $0x3a8] sm:$0xff]
    %v970 = vld [vmem:[#allocation5 + $0x3b8] sm:$0xff]
    %v971 = vld [vmem:[#allocation5 + $0x3c8] sm:$0xff]
    %v972 = vld [vmem:[#allocation5 + $0x3d8] sm:$0xff]
    %v973 = vld [vmem:[#allocation5 + $0x3e8] sm:$0xff]
    %v974 = vld [vmem:[#allocation5 + $0x3f8] sm:$0xff]
    %v976 = vlaneseq
    %v977 = vshrl.u32 %v976, 7
    %v978 = vsub.s32 0, %v977
    %v979 = vrot.slane %v84, %v978
    %v980 = vlaneseq
    %v981 = vshrl.u32 %v980, 7
    %v982 = vsub.s32 1, %v981
    %v983 = vrot.slane %v84, %v982
    %v1050 = vunpack.c.l.b16 %v911
    %v1051 = vunpack.c.h.b16 %v911
    %v1052 = vunpack.c.l.b16 %v912
    %v1053 = vunpack.c.h.b16 %v912
    %v1054 = vunpack.c.l.b16 %v913
    %v1055 = vunpack.c.h.b16 %v913
    %v1056 = vunpack.c.l.b16 %v914
    %v1057 = vunpack.c.h.b16 %v914
    %v1058 = vunpack.c.l.b16 %v915
    %v1059 = vunpack.c.h.b16 %v915
    %v1060 = vunpack.c.l.b16 %v916
    %v1061 = vunpack.c.h.b16 %v916
    %v1062 = vunpack.c.l.b16 %v917
    %v1063 = vunpack.c.h.b16 %v917
    %v1064 = vunpack.c.l.b16 %v918
    %v1065 = vunpack.c.h.b16 %v918
    %v1066 = vunpack.c.l.b16 %v919
    %v1067 = vunpack.c.h.b16 %v919
    %v1068 = vunpack.c.l.b16 %v920
    %v1069 = vunpack.c.h.b16 %v920
    %v1070 = vunpack.c.l.b16 %v921
    %v1071 = vunpack.c.h.b16 %v921
    %v1072 = vunpack.c.l.b16 %v922
    %v1073 = vunpack.c.h.b16 %v922
    %v1074 = vunpack.c.l.b16 %v923
    %v1075 = vunpack.c.h.b16 %v923
    %v1076 = vunpack.c.l.b16 %v924
    %v1077 = vunpack.c.h.b16 %v924
    %v1078 = vunpack.c.l.b16 %v925
    %v1079 = vunpack.c.h.b16 %v925
    %v1080 = vunpack.c.l.b16 %v926
    %v1081 = vunpack.c.h.b16 %v926
    %v1082 = vunpack.c.l.b16 %v927
    %v1083 = vunpack.c.h.b16 %v927
    %v1084 = vunpack.c.l.b16 %v928
    %v1085 = vunpack.c.h.b16 %v928
    %v1086 = vunpack.c.l.b16 %v929
    %v1087 = vunpack.c.h.b16 %v929
    %v1088 = vunpack.c.l.b16 %v930
    %v1089 = vunpack.c.h.b16 %v930
    %v1090 = vunpack.c.l.b16 %v931
    %v1091 = vunpack.c.h.b16 %v931
    %v1092 = vunpack.c.l.b16 %v932
    %v1093 = vunpack.c.h.b16 %v932
    %v1094 = vunpack.c.l.b16 %v933
    %v1095 = vunpack.c.h.b16 %v933
    %v1096 = vunpack.c.l.b16 %v934
    %v1097 = vunpack.c.h.b16 %v934
    %v1098 = vunpack.c.l.b16 %v935
    %v1099 = vunpack.c.h.b16 %v935
    %v1100 = vunpack.c.l.b16 %v936
    %v1101 = vunpack.c.h.b16 %v936
    %v1102 = vunpack.c.l.b16 %v937
    %v1103 = vunpack.c.h.b16 %v937
    %v1104 = vunpack.c.l.b16 %v938
    %v1105 = vunpack.c.h.b16 %v938
    %v1106 = vunpack.c.l.b16 %v939
    %v1107 = vunpack.c.h.b16 %v939
    %v1108 = vunpack.c.l.b16 %v940
    %v1109 = vunpack.c.h.b16 %v940
    %v1110 = vunpack.c.l.b16 %v941
    %v1111 = vunpack.c.h.b16 %v941
    %v1112 = vunpack.c.l.b16 %v942
    %v1113 = vunpack.c.h.b16 %v942
    %v1114 = vunpack.c.l.b16 %v943
    %v1115 = vunpack.c.h.b16 %v943
    %v1116 = vunpack.c.l.b16 %v944
    %v1117 = vunpack.c.h.b16 %v944
    %v1118 = vunpack.c.l.b16 %v945
    %v1119 = vunpack.c.h.b16 %v945
    %v1120 = vunpack.c.l.b16 %v946
    %v1121 = vunpack.c.h.b16 %v946
    %v1122 = vunpack.c.l.b16 %v947
    %v1123 = vunpack.c.h.b16 %v947
    %v1124 = vunpack.c.l.b16 %v948
    %v1125 = vunpack.c.h.b16 %v948
    %v1126 = vunpack.c.l.b16 %v949
    %v1127 = vunpack.c.h.b16 %v949
    %v1128 = vunpack.c.l.b16 %v950
    %v1129 = vunpack.c.h.b16 %v950
    %v1130 = vunpack.c.l.b16 %v951
    %v1131 = vunpack.c.h.b16 %v951
    %v1132 = vunpack.c.l.b16 %v952
    %v1133 = vunpack.c.h.b16 %v952
    %v1134 = vunpack.c.l.b16 %v953
    %v1135 = vunpack.c.h.b16 %v953
    %v1136 = vunpack.c.l.b16 %v954
    %v1137 = vunpack.c.h.b16 %v954
    %v1138 = vunpack.c.l.b16 %v955
    %v1139 = vunpack.c.h.b16 %v955
    %v1140 = vunpack.c.l.b16 %v956
    %v1141 = vunpack.c.h.b16 %v956
    %v1142 = vunpack.c.l.b16 %v957
    %v1143 = vunpack.c.h.b16 %v957
    %v1144 = vunpack.c.l.b16 %v958
    %v1145 = vunpack.c.h.b16 %v958
    %v1146 = vunpack.c.l.b16 %v959
    %v1147 = vunpack.c.h.b16 %v959
    %v1148 = vunpack.c.l.b16 %v960
    %v1149 = vunpack.c.h.b16 %v960
    %v1150 = vunpack.c.l.b16 %v961
    %v1151 = vunpack.c.h.b16 %v961
    %v1152 = vunpack.c.l.b16 %v962
    %v1153 = vunpack.c.h.b16 %v962
    %v1154 = vunpack.c.l.b16 %v963
    %v1155 = vunpack.c.h.b16 %v963
    %v1156 = vunpack.c.l.b16 %v964
    %v1157 = vunpack.c.h.b16 %v964
    %v1158 = vunpack.c.l.b16 %v965
    %v1159 = vunpack.c.h.b16 %v965
    %v1160 = vunpack.c.l.b16 %v966
    %v1161 = vunpack.c.h.b16 %v966
    %v1162 = vunpack.c.l.b16 %v967
    %v1163 = vunpack.c.h.b16 %v967
    %v1164 = vunpack.c.l.b16 %v968
    %v1165 = vunpack.c.h.b16 %v968
    %v1166 = vunpack.c.l.b16 %v969
    %v1167 = vunpack.c.h.b16 %v969
    %v1168 = vunpack.c.l.b16 %v970
    %v1169 = vunpack.c.h.b16 %v970
    %v1170 = vunpack.c.l.b16 %v971
    %v1171 = vunpack.c.h.b16 %v971
    %v1172 = vunpack.c.l.b16 %v972
    %v1173 = vunpack.c.h.b16 %v972
    %v1174 = vunpack.c.l.b16 %v973
    %v1175 = vunpack.c.h.b16 %v973
    %v1176 = vunpack.c.l.b16 %v974
    %v1177 = vunpack.c.h.b16 %v974
    %v1178 = vpack.c.b16 %v1052, %v1050
    %v1179 = vpack.c.b16 %v1053, %v1051
    %v1180 = vpack.c.b16 %v1056, %v1054
    %v1181 = vpack.c.b16 %v1057, %v1055
    %v1182 = vpack.c.b16 %v1060, %v1058
    %v1183 = vpack.c.b16 %v1061, %v1059
    %v1184 = vpack.c.b16 %v1064, %v1062
    %v1185 = vpack.c.b16 %v1065, %v1063
    %v1186 = vpack.c.b16 %v1068, %v1066
    %v1187 = vpack.c.b16 %v1069, %v1067
    %v1188 = vpack.c.b16 %v1072, %v1070
    %v1189 = vpack.c.b16 %v1073, %v1071
    %v1190 = vpack.c.b16 %v1076, %v1074
    %v1191 = vpack.c.b16 %v1077, %v1075
    %v1192 = vpack.c.b16 %v1080, %v1078
    %v1193 = vpack.c.b16 %v1081, %v1079
    %v1194 = vpack.c.b16 %v1084, %v1082
    %v1195 = vpack.c.b16 %v1085, %v1083
    %v1196 = vpack.c.b16 %v1088, %v1086
    %v1197 = vpack.c.b16 %v1089, %v1087
    %v1198 = vpack.c.b16 %v1092, %v1090
    %v1199 = vpack.c.b16 %v1093, %v1091
    %v1200 = vpack.c.b16 %v1096, %v1094
    %v1201 = vpack.c.b16 %v1097, %v1095
    %v1202 = vpack.c.b16 %v1100, %v1098
    %v1203 = vpack.c.b16 %v1101, %v1099
    %v1204 = vpack.c.b16 %v1104, %v1102
    %v1205 = vpack.c.b16 %v1105, %v1103
    %v1206 = vpack.c.b16 %v1108, %v1106
    %v1207 = vpack.c.b16 %v1109, %v1107
    %v1208 = vpack.c.b16 %v1112, %v1110
    %v1209 = vpack.c.b16 %v1113, %v1111
    %v1210 = vpack.c.b16 %v1116, %v1114
    %v1211 = vpack.c.b16 %v1117, %v1115
    %v1212 = vpack.c.b16 %v1120, %v1118
    %v1213 = vpack.c.b16 %v1121, %v1119
    %v1214 = vpack.c.b16 %v1124, %v1122
    %v1215 = vpack.c.b16 %v1125, %v1123
    %v1216 = vpack.c.b16 %v1128, %v1126
    %v1217 = vpack.c.b16 %v1129, %v1127
    %v1218 = vpack.c.b16 %v1132, %v1130
    %v1219 = vpack.c.b16 %v1133, %v1131
    %v1220 = vpack.c.b16 %v1136, %v1134
    %v1221 = vpack.c.b16 %v1137, %v1135
    %v1222 = vpack.c.b16 %v1140, %v1138
    %v1223 = vpack.c.b16 %v1141, %v1139
    %v1224 = vpack.c.b16 %v1144, %v1142
    %v1225 = vpack.c.b16 %v1145, %v1143
    %v1226 = vpack.c.b16 %v1148, %v1146
    %v1227 = vpack.c.b16 %v1149, %v1147
    %v1228 = vpack.c.b16 %v1152, %v1150
    %v1229 = vpack.c.b16 %v1153, %v1151
    %v1230 = vpack.c.b16 %v1156, %v1154
    %v1231 = vpack.c.b16 %v1157, %v1155
    %v1232 = vpack.c.b16 %v1160, %v1158
    %v1233 = vpack.c.b16 %v1161, %v1159
    %v1234 = vpack.c.b16 %v1164, %v1162
    %v1235 = vpack.c.b16 %v1165, %v1163
    %v1236 = vpack.c.b16 %v1168, %v1166
    %v1237 = vpack.c.b16 %v1169, %v1167
    %v1238 = vpack.c.b16 %v1172, %v1170
    %v1239 = vpack.c.b16 %v1173, %v1171
    %v1240 = vpack.c.b16 %v1176, %v1174
    %v1241 = vpack.c.b16 %v1177, %v1175
    %1306 = vmatprep.subr.bf16.mxu0 %v1179
    %1307 = vmatpush1.bf16.msra.mxu0 %v1178
    %1308 = vmatprep.subr.bf16.mxu0 %v1181
    %1309 = vmatpush1.bf16.msra.mxu0 %v1180
    %1310 = vmatprep.subr.bf16.mxu0 %v1183
    %1311 = vmatpush1.bf16.msra.mxu0 %v1182
    %1312 = vmatprep.subr.bf16.mxu0 %v1185
    %1313 = vmatpush1.bf16.msra.mxu0 %v1184
    %1314 = vmatprep.subr.bf16.mxu0 %v1187
    %1315 = vmatpush1.bf16.msra.mxu0 %v1186
    %1316 = vmatprep.subr.bf16.mxu0 %v1189
    %1317 = vmatpush1.bf16.msra.mxu0 %v1188
    %1318 = vmatprep.subr.bf16.mxu0 %v1191
    %1319 = vmatpush1.bf16.msra.mxu0 %v1190
    %1320 = vmatprep.subr.bf16.mxu0 %v1193
    %1321 = vmatpush1.bf16.msra.mxu0 %v1192
    %1322 = vmatprep.subr.bf16.mxu0 %v1195
    %1323 = vmatpush1.bf16.msra.mxu0 %v1194
    %1324 = vmatprep.subr.bf16.mxu0 %v1197
    %1325 = vmatpush1.bf16.msra.mxu0 %v1196
    %1326 = vmatprep.subr.bf16.mxu0 %v1199
    %1327 = vmatpush1.bf16.msra.mxu0 %v1198
    %1328 = vmatprep.subr.bf16.mxu0 %v1201
    %1329 = vmatpush1.bf16.msra.mxu0 %v1200
    %1330 = vmatprep.subr.bf16.mxu0 %v1203
    %1331 = vmatpush1.bf16.msra.mxu0 %v1202
    %1332 = vmatprep.subr.bf16.mxu0 %v1205
    %1333 = vmatpush1.bf16.msra.mxu0 %v1204
    %1334 = vmatprep.subr.bf16.mxu0 %v1207
    %1335 = vmatpush1.bf16.msra.mxu0 %v1206
    %1336 = vmatprep.subr.bf16.mxu0 %v1209
    %1337 = vmatpush1.bf16.msra.mxu0 %v1208
    %1338 = vmatprep.mubr.bf16.mxu0 %v427
    %1339 = vmatmul.mubr.bf16.gmra.mrb[0].mxu0 %v426
    %v1340 = vpop.f32.mrb[0].mxu0
    %v1341 = vadd.f32 %v979, %v1340
    %v1342 = vpop.f32.mrb[0].mxu0
    %v1343 = vadd.f32 %v983, %v1342
    %v1344 = vpop.f32.mrb[0].mxu0
    %v1345 = vpop.f32.mrb[0].mxu0
    %1346 = vdwg.mxu0
    %1347 = vmatprep.subr.bf16.mxu0 %v1211
    %1348 = vmatpush1.bf16.msra.mxu0 %v1210
    %1349 = vmatprep.subr.bf16.mxu0 %v1213
    %1350 = vmatpush1.bf16.msra.mxu0 %v1212
    %1351 = vmatprep.subr.bf16.mxu0 %v1215
    %1352 = vmatpush1.bf16.msra.mxu0 %v1214
    %1353 = vmatprep.subr.bf16.mxu0 %v1217
    %1354 = vmatpush1.bf16.msra.mxu0 %v1216
    %1355 = vmatprep.subr.bf16.mxu0 %v1219
    %1356 = vmatpush1.bf16.msra.mxu0 %v1218
    %1357 = vmatprep.subr.bf16.mxu0 %v1221
    %1358 = vmatpush1.bf16.msra.mxu0 %v1220
    %1359 = vmatprep.subr.bf16.mxu0 %v1223
    %1360 = vmatpush1.bf16.msra.mxu0 %v1222
    %1361 = vmatprep.subr.bf16.mxu0 %v1225
    %1362 = vmatpush1.bf16.msra.mxu0 %v1224
    %1363 = vmatprep.subr.bf16.mxu0 %v1227
    %1364 = vmatpush1.bf16.msra.mxu0 %v1226
    %1365 = vmatprep.subr.bf16.mxu0 %v1229
    %1366 = vmatpush1.bf16.msra.mxu0 %v1228
    %1367 = vmatprep.subr.bf16.mxu0 %v1231
    %1368 = vmatpush1.bf16.msra.mxu0 %v1230
    %1369 = vmatprep.subr.bf16.mxu0 %v1233
    %1370 = vmatpush1.bf16.msra.mxu0 %v1232
    %1371 = vmatprep.subr.bf16.mxu0 %v1235
    %1372 = vmatpush1.bf16.msra.mxu0 %v1234
    %1373 = vmatprep.subr.bf16.mxu0 %v1237
    %1374 = vmatpush1.bf16.msra.mxu0 %v1236
    %1375 = vmatprep.subr.bf16.mxu0 %v1239
    %1376 = vmatpush1.bf16.msra.mxu0 %v1238
    %1377 = vmatprep.subr.bf16.mxu0 %v1241
    %1378 = vmatpush1.bf16.msra.mxu0 %v1240
    %1379 = vmatprep.mubr.bf16.mxu0 %v429
    %1380 = vmatmul.mubr.bf16.gmra.mrb[0].mxu0 %v428
    %v1381 = vpop.f32.mrb[0].mxu0
    %v1382 = vadd.f32 %v1341, %v1381
    %v1383 = vpop.f32.mrb[0].mxu0
    %v1384 = vadd.f32 %v1343, %v1383
    %v1385 = vpop.f32.mrb[0].mxu0
    %v1386 = vpop.f32.mrb[0].mxu0
    %1387 = vdwg.mxu0
    %v1388 = vmax.f32 %v1382, 0.0
    %v1389 = vmax.f32 %v1384, 0.0
    %v1390 = vpack.c.bf16 %v1388, %v1388
    %v1391 = vpack.c.bf16 %v1389, %v1389
    %v1392 = vld [vmem:[#allocation7] sm:$0xf]
    %v1393 = vld [vmem:[#allocation7 + $0x8] sm:$0xf]
    %v1394 = vld [vmem:[#allocation7 + $0x10] sm:$0xf]
    %v1395 = vld [vmem:[#allocation7 + $0x18] sm:$0xf]
    %v1396 = vld [vmem:[#allocation7 + $0x20] sm:$0xf]
    %v1397 = vld [vmem:[#allocation7 + $0x28] sm:$0xf]
    %v1398 = vld [vmem:[#allocation7 + $0x30] sm:$0xf]
    %v1399 = vld [vmem:[#allocation7 + $0x38] sm:$0xf]
    %v1400 = vld [vmem:[#allocation7 + $0x40] sm:$0xf]
    %v1401 = vld [vmem:[#allocation7 + $0x48] sm:$0xf]
    %v1402 = vld [vmem:[#allocation7 + $0x50] sm:$0xf]
    %v1403 = vld [vmem:[#allocation7 + $0x58] sm:$0xf]
    %v1404 = vld [vmem:[#allocation7 + $0x60] sm:$0xf]
    %v1405 = vld [vmem:[#allocation7 + $0x68] sm:$0xf]
    %v1406 = vld [vmem:[#allocation7 + $0x70] sm:$0xf]
    %v1407 = vld [vmem:[#allocation7 + $0x78] sm:$0xf]
    %v1408 = vld [vmem:[#allocation7 + $0x80] sm:$0xf]
    %v1409 = vld [vmem:[#allocation7 + $0x88] sm:$0xf]
    %v1410 = vld [vmem:[#allocation7 + $0x90] sm:$0xf]
    %v1411 = vld [vmem:[#allocation7 + $0x98] sm:$0xf]
    %v1412 = vld [vmem:[#allocation7 + $0xa0] sm:$0xf]
    %v1413 = vld [vmem:[#allocation7 + $0xa8] sm:$0xf]
    %v1414 = vld [vmem:[#allocation7 + $0xb0] sm:$0xf]
    %v1415 = vld [vmem:[#allocation7 + $0xb8] sm:$0xf]
    %v1416 = vld [vmem:[#allocation7 + $0xc0] sm:$0xf]
    %v1417 = vld [vmem:[#allocation7 + $0xc8] sm:$0xf]
    %v1418 = vld [vmem:[#allocation7 + $0xd0] sm:$0xf]
    %v1419 = vld [vmem:[#allocation7 + $0xd8] sm:$0xf]
    %v1420 = vld [vmem:[#allocation7 + $0xe0] sm:$0xf]
    %v1421 = vld [vmem:[#allocation7 + $0xe8] sm:$0xf]
    %v1422 = vld [vmem:[#allocation7 + $0xf0] sm:$0xf]
    %v1423 = vld [vmem:[#allocation7 + $0xf8] sm:$0xf]
    %v1425 = vlaneseq
    %v1426 = vshrl.u32 %v1425, 7
    %v1427 = vsub.s32 0, %v1426
    %v1428 = vrot.slane %v85, %v1427
    %v1462 = vunpack.c.l.b16 %v1392
    %v1463 = vunpack.c.l.b16 %v1393
    %v1464 = vunpack.c.l.b16 %v1394
    %v1465 = vunpack.c.l.b16 %v1395
    %v1466 = vunpack.c.l.b16 %v1396
    %v1467 = vunpack.c.l.b16 %v1397
    %v1468 = vunpack.c.l.b16 %v1398
    %v1469 = vunpack.c.l.b16 %v1399
    %v1470 = vunpack.c.l.b16 %v1400
    %v1471 = vunpack.c.l.b16 %v1401
    %v1472 = vunpack.c.l.b16 %v1402
    %v1473 = vunpack.c.l.b16 %v1403
    %v1474 = vunpack.c.l.b16 %v1404
    %v1475 = vunpack.c.l.b16 %v1405
    %v1476 = vunpack.c.l.b16 %v1406
    %v1477 = vunpack.c.l.b16 %v1407
    %v1478 = vunpack.c.l.b16 %v1408
    %v1479 = vunpack.c.l.b16 %v1409
    %v1480 = vunpack.c.l.b16 %v1410
    %v1481 = vunpack.c.l.b16 %v1411
    %v1482 = vunpack.c.l.b16 %v1412
    %v1483 = vunpack.c.l.b16 %v1413
    %v1484 = vunpack.c.l.b16 %v1414
    %v1485 = vunpack.c.l.b16 %v1415
    %v1486 = vunpack.c.l.b16 %v1416
    %v1487 = vunpack.c.l.b16 %v1417
    %v1488 = vunpack.c.l.b16 %v1418
    %v1489 = vunpack.c.l.b16 %v1419
    %v1490 = vunpack.c.l.b16 %v1420
    %v1491 = vunpack.c.l.b16 %v1421
    %v1492 = vunpack.c.l.b16 %v1422
    %v1493 = vunpack.c.l.b16 %v1423
    %v1494 = vpack.c.b16 %v1463, %v1462
    %v1495 = vpack.c.b16 %v1465, %v1464
    %v1496 = vpack.c.b16 %v1467, %v1466
    %v1497 = vpack.c.b16 %v1469, %v1468
    %v1498 = vpack.c.b16 %v1471, %v1470
    %v1499 = vpack.c.b16 %v1473, %v1472
    %v1500 = vpack.c.b16 %v1475, %v1474
    %v1501 = vpack.c.b16 %v1477, %v1476
    %v1502 = vpack.c.b16 %v1479, %v1478
    %v1503 = vpack.c.b16 %v1481, %v1480
    %v1504 = vpack.c.b16 %v1483, %v1482
    %v1505 = vpack.c.b16 %v1485, %v1484
    %v1506 = vpack.c.b16 %v1487, %v1486
    %v1507 = vpack.c.b16 %v1489, %v1488
    %v1508 = vpack.c.b16 %v1491, %v1490
    %v1509 = vpack.c.b16 %v1493, %v1492
    %1526 = vmatprep.subr.bf16.mxu0 0
    %1527 = vmatpush1.bf16.msra.mxu0 %v1494
    %1528 = vmatprep.subr.bf16.mxu0 0
    %1529 = vmatpush1.bf16.msra.mxu0 %v1495
    %1530 = vmatprep.subr.bf16.mxu0 0
    %1531 = vmatpush1.bf16.msra.mxu0 %v1496
    %1532 = vmatprep.subr.bf16.mxu0 0
    %1533 = vmatpush1.bf16.msra.mxu0 %v1497
    %1534 = vmatprep.subr.bf16.mxu0 0
    %1535 = vmatpush1.bf16.msra.mxu0 %v1498
    %1536 = vmatprep.subr.bf16.mxu0 0
    %1537 = vmatpush1.bf16.msra.mxu0 %v1499
    %1538 = vmatprep.subr.bf16.mxu0 0
    %1539 = vmatpush1.bf16.msra.mxu0 %v1500
    %1540 = vmatprep.subr.bf16.mxu0 0
    %1541 = vmatpush1.bf16.msra.mxu0 %v1501
    %1542 = vmatprep.subr.bf16.mxu0 0
    %1543 = vmatpush1.bf16.msra.mxu0 %v1502
    %1544 = vmatprep.subr.bf16.mxu0 0
    %1545 = vmatpush1.bf16.msra.mxu0 %v1503
    %1546 = vmatprep.subr.bf16.mxu0 0
    %1547 = vmatpush1.bf16.msra.mxu0 %v1504
    %1548 = vmatprep.subr.bf16.mxu0 0
    %1549 = vmatpush1.bf16.msra.mxu0 %v1505
    %1550 = vmatprep.subr.bf16.mxu0 0
    %1551 = vmatpush1.bf16.msra.mxu0 %v1506
    %1552 = vmatprep.subr.bf16.mxu0 0
    %1553 = vmatpush1.bf16.msra.mxu0 %v1507
    %1554 = vmatprep.subr.bf16.mxu0 0
    %1555 = vmatpush1.bf16.msra.mxu0 %v1508
    %1556 = vmatprep.subr.bf16.mxu0 0
    %1557 = vmatpush1.bf16.msra.mxu0 %v1509
    %1558 = vmatprep.mubr.bf16.mxu0 %v910
    %1559 = vmatmul.mubr.bf16.gmra.mrb[0].mxu0 %v909
    %v1560 = vpop.f32.mrb[0].mxu0
    %v1561 = vadd.f32 %v1428, %v1560
    %v1562 = vpop.f32.mrb[0].mxu0
    %v1563 = vpop.f32.mrb[0].mxu0
    %v1564 = vpop.f32.mrb[0].mxu0
    %1565 = vdwg.mxu0
    %v1566 = vmax.f32 %v1561, 0.0
    %v1567 = vpack.c.bf16 %v1566, %v1566
    %v1568 = vld [vmem:[#allocation7 + $0x4] sm:$0xf]
    %v1569 = vld [vmem:[#allocation7 + $0xc] sm:$0xf]
    %v1570 = vld [vmem:[#allocation7 + $0x14] sm:$0xf]
    %v1571 = vld [vmem:[#allocation7 + $0x1c] sm:$0xf]
    %v1572 = vld [vmem:[#allocation7 + $0x24] sm:$0xf]
    %v1573 = vld [vmem:[#allocation7 + $0x2c] sm:$0xf]
    %v1574 = vld [vmem:[#allocation7 + $0x34] sm:$0xf]
    %v1575 = vld [vmem:[#allocation7 + $0x3c] sm:$0xf]
    %v1576 = vld [vmem:[#allocation7 + $0x44] sm:$0xf]
    %v1577 = vld [vmem:[#allocation7 + $0x4c] sm:$0xf]
    %v1578 = vld [vmem:[#allocation7 + $0x54] sm:$0xf]
    %v1579 = vld [vmem:[#allocation7 + $0x5c] sm:$0xf]
    %v1580 = vld [vmem:[#allocation7 + $0x64] sm:$0xf]
    %v1581 = vld [vmem:[#allocation7 + $0x6c] sm:$0xf]
    %v1582 = vld [vmem:[#allocation7 + $0x74] sm:$0xf]
    %v1583 = vld [vmem:[#allocation7 + $0x7c] sm:$0xf]
    %v1584 = vld [vmem:[#allocation7 + $0x84] sm:$0xf]
    %v1585 = vld [vmem:[#allocation7 + $0x8c] sm:$0xf]
    %v1586 = vld [vmem:[#allocation7 + $0x94] sm:$0xf]
    %v1587 = vld [vmem:[#allocation7 + $0x9c] sm:$0xf]
    %v1588 = vld [vmem:[#allocation7 + $0xa4] sm:$0xf]
    %v1589 = vld [vmem:[#allocation7 + $0xac] sm:$0xf]
    %v1590 = vld [vmem:[#allocation7 + $0xb4] sm:$0xf]
    %v1591 = vld [vmem:[#allocation7 + $0xbc] sm:$0xf]
    %v1592 = vld [vmem:[#allocation7 + $0xc4] sm:$0xf]
    %v1593 = vld [vmem:[#allocation7 + $0xcc] sm:$0xf]
    %v1594 = vld [vmem:[#allocation7 + $0xd4] sm:$0xf]
    %v1595 = vld [vmem:[#allocation7 + $0xdc] sm:$0xf]
    %v1596 = vld [vmem:[#allocation7 + $0xe4] sm:$0xf]
    %v1597 = vld [vmem:[#allocation7 + $0xec] sm:$0xf]
    %v1598 = vld [vmem:[#allocation7 + $0xf4] sm:$0xf]
    %v1599 = vld [vmem:[#allocation7 + $0xfc] sm:$0xf]
    %v1601 = vlaneseq
    %v1602 = vshrl.u32 %v1601, 7
    %v1603 = vsub.s32 0, %v1602
    %v1604 = vrot.slane %v86, %v1603
    %v1638 = vunpack.c.l.b16 %v1568
    %v1639 = vunpack.c.l.b16 %v1569
    %v1640 = vunpack.c.l.b16 %v1570
    %v1641 = vunpack.c.l.b16 %v1571
    %v1642 = vunpack.c.l.b16 %v1572
    %v1643 = vunpack.c.l.b16 %v1573
    %v1644 = vunpack.c.l.b16 %v1574
    %v1645 = vunpack.c.l.b16 %v1575
    %v1646 = vunpack.c.l.b16 %v1576
    %v1647 = vunpack.c.l.b16 %v1577
    %v1648 = vunpack.c.l.b16 %v1578
    %v1649 = vunpack.c.l.b16 %v1579
    %v1650 = vunpack.c.l.b16 %v1580
    %v1651 = vunpack.c.l.b16 %v1581
    %v1652 = vunpack.c.l.b16 %v1582
    %v1653 = vunpack.c.l.b16 %v1583
    %v1654 = vunpack.c.l.b16 %v1584
    %v1655 = vunpack.c.l.b16 %v1585
    %v1656 = vunpack.c.l.b16 %v1586
    %v1657 = vunpack.c.l.b16 %v1587
    %v1658 = vunpack.c.l.b16 %v1588
    %v1659 = vunpack.c.l.b16 %v1589
    %v1660 = vunpack.c.l.b16 %v1590
    %v1661 = vunpack.c.l.b16 %v1591
    %v1662 = vunpack.c.l.b16 %v1592
    %v1663 = vunpack.c.l.b16 %v1593
    %v1664 = vunpack.c.l.b16 %v1594
    %v1665 = vunpack.c.l.b16 %v1595
    %v1666 = vunpack.c.l.b16 %v1596
    %v1667 = vunpack.c.l.b16 %v1597
    %v1668 = vunpack.c.l.b16 %v1598
    %v1669 = vunpack.c.l.b16 %v1599
    %v1670 = vpack.c.b16 %v1639, %v1638
    %v1671 = vpack.c.b16 %v1641, %v1640
    %v1672 = vpack.c.b16 %v1643, %v1642
    %v1673 = vpack.c.b16 %v1645, %v1644
    %v1674 = vpack.c.b16 %v1647, %v1646
    %v1675 = vpack.c.b16 %v1649, %v1648
    %v1676 = vpack.c.b16 %v1651, %v1650
    %v1677 = vpack.c.b16 %v1653, %v1652
    %v1678 = vpack.c.b16 %v1655, %v1654
    %v1679 = vpack.c.b16 %v1657, %v1656
    %v1680 = vpack.c.b16 %v1659, %v1658
    %v1681 = vpack.c.b16 %v1661, %v1660
    %v1682 = vpack.c.b16 %v1663, %v1662
    %v1683 = vpack.c.b16 %v1665, %v1664
    %v1684 = vpack.c.b16 %v1667, %v1666
    %v1685 = vpack.c.b16 %v1669, %v1668
    %1702 = vmatprep.subr.bf16.mxu0 0
    %1703 = vmatpush1.bf16.msra.mxu0 %v1670
    %1704 = vmatprep.subr.bf16.mxu0 0
    %1705 = vmatpush1.bf16.msra.mxu0 %v1671
    %1706 = vmatprep.subr.bf16.mxu0 0
    %1707 = vmatpush1.bf16.msra.mxu0 %v1672
    %1708 = vmatprep.subr.bf16.mxu0 0
    %1709 = vmatpush1.bf16.msra.mxu0 %v1673
    %1710 = vmatprep.subr.bf16.mxu0 0
    %1711 = vmatpush1.bf16.msra.mxu0 %v1674
    %1712 = vmatprep.subr.bf16.mxu0 0
    %1713 = vmatpush1.bf16.msra.mxu0 %v1675
    %1714 = vmatprep.subr.bf16.mxu0 0
    %1715 = vmatpush1.bf16.msra.mxu0 %v1676
    %1716 = vmatprep.subr.bf16.mxu0 0
    %1717 = vmatpush1.bf16.msra.mxu0 %v1677
    %1718 = vmatprep.subr.bf16.mxu0 0
    %1719 = vmatpush1.bf16.msra.mxu0 %v1678
    %1720 = vmatprep.subr.bf16.mxu0 0
    %1721 = vmatpush1.bf16.msra.mxu0 %v1679
    %1722 = vmatprep.subr.bf16.mxu0 0
    %1723 = vmatpush1.bf16.msra.mxu0 %v1680
    %1724 = vmatprep.subr.bf16.mxu0 0
    %1725 = vmatpush1.bf16.msra.mxu0 %v1681
    %1726 = vmatprep.subr.bf16.mxu0 0
    %1727 = vmatpush1.bf16.msra.mxu0 %v1682
    %1728 = vmatprep.subr.bf16.mxu0 0
    %1729 = vmatpush1.bf16.msra.mxu0 %v1683
    %1730 = vmatprep.subr.bf16.mxu0 0
    %1731 = vmatpush1.bf16.msra.mxu0 %v1684
    %1732 = vmatprep.subr.bf16.mxu0 0
    %1733 = vmatpush1.bf16.msra.mxu0 %v1685
    %1734 = vmatprep.mubr.bf16.mxu0 %v1391
    %1735 = vmatmul.mubr.bf16.gmra.mrb[0].mxu0 %v1390
    %v1736 = vpop.f32.mrb[0].mxu0
    %v1737 = vadd.f32 %v1604, %v1736
    %v1738 = vpop.f32.mrb[0].mxu0
    %v1739 = vpop.f32.mrb[0].mxu0
    %v1740 = vpop.f32.mrb[0].mxu0
    %1741 = vdwg.mxu0
    %v1742 = vmax.f32 %v1737, 0.0
    %v1743 = vpack.c.bf16 %v1742, %v1742
    %v1744 = vld [vmem:[#allocation8] sm:$0xf]
    %v1745 = vld [vmem:[#allocation8 + $0x4] sm:$0xf]
    %v1746 = vld [vmem:[#allocation8 + $0x8] sm:$0xf]
    %v1747 = vld [vmem:[#allocation8 + $0xc] sm:$0xf]
    %v1748 = vld [vmem:[#allocation8 + $0x10] sm:$0xf]
    %v1749 = vld [vmem:[#allocation8 + $0x14] sm:$0xf]
    %v1750 = vld [vmem:[#allocation8 + $0x18] sm:$0xf]
    %v1751 = vld [vmem:[#allocation8 + $0x1c] sm:$0xf]
    %v1752 = vld [vmem:[#allocation8 + $0x20] sm:$0xf]
    %v1753 = vld [vmem:[#allocation8 + $0x24] sm:$0xf]
    %v1754 = vld [vmem:[#allocation8 + $0x28] sm:$0xf]
    %v1755 = vld [vmem:[#allocation8 + $0x2c] sm:$0xf]
    %v1756 = vld [vmem:[#allocation8 + $0x30] sm:$0xf]
    %v1757 = vld [vmem:[#allocation8 + $0x34] sm:$0xf]
    %v1758 = vld [vmem:[#allocation8 + $0x38] sm:$0xf]
    %v1759 = vld [vmem:[#allocation8 + $0x3c] sm:$0xf]
    %v1760 = vld [vmem:[#allocation8 + $0x40] sm:$0xf]
    %v1761 = vld [vmem:[#allocation8 + $0x44] sm:$0xf]
    %v1762 = vld [vmem:[#allocation8 + $0x48] sm:$0xf]
    %v1763 = vld [vmem:[#allocation8 + $0x4c] sm:$0xf]
    %v1764 = vld [vmem:[#allocation8 + $0x50] sm:$0xf]
    %v1765 = vld [vmem:[#allocation8 + $0x54] sm:$0xf]
    %v1766 = vld [vmem:[#allocation8 + $0x58] sm:$0xf]
    %v1767 = vld [vmem:[#allocation8 + $0x5c] sm:$0xf]
    %v1768 = vld [vmem:[#allocation8 + $0x60] sm:$0xf]
    %v1769 = vld [vmem:[#allocation8 + $0x64] sm:$0xf]
    %v1770 = vld [vmem:[#allocation8 + $0x68] sm:$0xf]
    %v1771 = vld [vmem:[#allocation8 + $0x6c] sm:$0xf]
    %v1772 = vld [vmem:[#allocation8 + $0x70] sm:$0xf]
    %v1773 = vld [vmem:[#allocation8 + $0x74] sm:$0xf]
    %v1774 = vld [vmem:[#allocation8 + $0x78] sm:$0xf]
    %v1775 = vld [vmem:[#allocation8 + $0x7c] sm:$0xf]
    %v1792 = vunpack.c.l.b16 %v1760
    %v1793 = vunpack.c.l.b16 %v1761
    %v1794 = vunpack.c.l.b16 %v1762
    %v1795 = vunpack.c.l.b16 %v1763
    %v1796 = vunpack.c.l.b16 %v1764
    %v1797 = vunpack.c.l.b16 %v1765
    %v1798 = vunpack.c.l.b16 %v1766
    %v1799 = vunpack.c.l.b16 %v1767
    %v1800 = vunpack.c.l.b16 %v1768
    %v1801 = vunpack.c.l.b16 %v1769
    %v1802 = vunpack.c.l.b16 %v1770
    %v1803 = vunpack.c.l.b16 %v1771
    %v1804 = vunpack.c.l.b16 %v1772
    %v1805 = vunpack.c.l.b16 %v1773
    %v1806 = vunpack.c.l.b16 %v1774
    %v1807 = vunpack.c.l.b16 %v1775
    %v1808 = vpack.c.b16 %v1793, %v1792
    %v1809 = vpack.c.b16 %v1795, %v1794
    %v1810 = vpack.c.b16 %v1797, %v1796
    %v1811 = vpack.c.b16 %v1799, %v1798
    %v1812 = vpack.c.b16 %v1801, %v1800
    %v1813 = vpack.c.b16 %v1803, %v1802
    %v1814 = vpack.c.b16 %v1805, %v1804
    %v1815 = vpack.c.b16 %v1807, %v1806
    %1824 = vmatprep.subr.bf16.mxu0 0
    %1825 = vmatpush1.bf16.msra.mxu0 %v1808
    %1826 = vmatprep.subr.bf16.mxu0 0
    %1827 = vmatpush1.bf16.msra.mxu0 %v1809
    %1828 = vmatprep.subr.bf16.mxu0 0
    %1829 = vmatpush1.bf16.msra.mxu0 %v1810
    %1830 = vmatprep.subr.bf16.mxu0 0
    %1831 = vmatpush1.bf16.msra.mxu0 %v1811
    %1832 = vmatprep.subr.bf16.mxu0 0
    %1833 = vmatpush1.bf16.msra.mxu0 %v1812
    %1834 = vmatprep.subr.bf16.mxu0 0
    %1835 = vmatpush1.bf16.msra.mxu0 %v1813
    %1836 = vmatprep.subr.bf16.mxu0 0
    %1837 = vmatpush1.bf16.msra.mxu0 %v1814
    %1838 = vmatprep.subr.bf16.mxu0 0
    %1839 = vmatpush1.bf16.msra.mxu0 %v1815
    %1840 = vmatprep.subr.bf16.mxu0 0
    %1841 = vmatpush1.bf16.msra.mxu0 0
    %1842 = vmatprep.subr.bf16.mxu0 0
    %1843 = vmatpush1.bf16.msra.mxu0 0
    %1844 = vmatprep.subr.bf16.mxu0 0
    %1845 = vmatpush1.bf16.msra.mxu0 0
    %1846 = vmatprep.subr.bf16.mxu0 0
    %1847 = vmatpush1.bf16.msra.mxu0 0
    %1848 = vmatprep.subr.bf16.mxu0 0
    %1849 = vmatpush1.bf16.msra.mxu0 0
    %1850 = vmatprep.subr.bf16.mxu0 0
    %1851 = vmatpush1.bf16.msra.mxu0 0
    %1852 = vmatprep.subr.bf16.mxu0 0
    %1853 = vmatpush1.bf16.msra.mxu0 0
    %1854 = vmatprep.subr.bf16.mxu0 0
    %1855 = vmatpush1.bf16.msra.mxu0 0
    %1856 = vmatprep.mubr.bf16.mxu0 0
    %1857 = vmatmul.mubr.bf16.gmra.mrb[0].mxu0 %v1743
    %v1858 = vpop.f32.mrb[0].mxu0
    %v1859 = vadd.f32 0.0, %v1858
    %v1860 = vpop.f32.mrb[0].mxu0
    %v1861 = vpop.f32.mrb[0].mxu0
    %v1862 = vpop.f32.mrb[0].mxu0
    %1863 = vdwg.mxu0
    %v1880 = vunpack.c.l.b16 %v1744
    %v1881 = vunpack.c.l.b16 %v1745
    %v1882 = vunpack.c.l.b16 %v1746
    %v1883 = vunpack.c.l.b16 %v1747
    %v1884 = vunpack.c.l.b16 %v1748
    %v1885 = vunpack.c.l.b16 %v1749
    %v1886 = vunpack.c.l.b16 %v1750
    %v1887 = vunpack.c.l.b16 %v1751
    %v1888 = vunpack.c.l.b16 %v1752
    %v1889 = vunpack.c.l.b16 %v1753
    %v1890 = vunpack.c.l.b16 %v1754
    %v1891 = vunpack.c.l.b16 %v1755
    %v1892 = vunpack.c.l.b16 %v1756
    %v1893 = vunpack.c.l.b16 %v1757
    %v1894 = vunpack.c.l.b16 %v1758
    %v1895 = vunpack.c.l.b16 %v1759
    %v1896 = vpack.c.b16 %v1881, %v1880
    %v1897 = vpack.c.b16 %v1883, %v1882
    %v1898 = vpack.c.b16 %v1885, %v1884
    %v1899 = vpack.c.b16 %v1887, %v1886
    %v1900 = vpack.c.b16 %v1889, %v1888
    %v1901 = vpack.c.b16 %v1891, %v1890
    %v1902 = vpack.c.b16 %v1893, %v1892
    %v1903 = vpack.c.b16 %v1895, %v1894
    %1912 = vmatprep.subr.bf16.mxu0 0
    %1913 = vmatpush1.bf16.msra.mxu0 %v1896
    %1914 = vmatprep.subr.bf16.mxu0 0
    %1915 = vmatpush1.bf16.msra.mxu0 %v1897
    %1916 = vmatprep.subr.bf16.mxu0 0
    %1917 = vmatpush1.bf16.msra.mxu0 %v1898
    %1918 = vmatprep.subr.bf16.mxu0 0
    %1919 = vmatpush1.bf16.msra.mxu0 %v1899
    %1920 = vmatprep.subr.bf16.mxu0 0
    %1921 = vmatpush1.bf16.msra.mxu0 %v1900
    %1922 = vmatprep.subr.bf16.mxu0 0
    %1923 = vmatpush1.bf16.msra.mxu0 %v1901
    %1924 = vmatprep.subr.bf16.mxu0 0
    %1925 = vmatpush1.bf16.msra.mxu0 %v1902
    %1926 = vmatprep.subr.bf16.mxu0 0
    %1927 = vmatpush1.bf16.msra.mxu0 %v1903
    %1928 = vmatprep.subr.bf16.mxu0 0
    %1929 = vmatpush1.bf16.msra.mxu0 0
    %1930 = vmatprep.subr.bf16.mxu0 0
    %1931 = vmatpush1.bf16.msra.mxu0 0
    %1932 = vmatprep.subr.bf16.mxu0 0
    %1933 = vmatpush1.bf16.msra.mxu0 0
    %1934 = vmatprep.subr.bf16.mxu0 0
    %1935 = vmatpush1.bf16.msra.mxu0 0
    %1936 = vmatprep.subr.bf16.mxu0 0
    %1937 = vmatpush1.bf16.msra.mxu0 0
    %1938 = vmatprep.subr.bf16.mxu0 0
    %1939 = vmatpush1.bf16.msra.mxu0 0
    %1940 = vmatprep.subr.bf16.mxu0 0
    %1941 = vmatpush1.bf16.msra.mxu0 0
    %1942 = vmatprep.subr.bf16.mxu0 0
    %1943 = vmatpush1.bf16.msra.mxu0 0
    %1944 = vmatprep.mubr.bf16.mxu0 0
    %1945 = vmatmul.mubr.bf16.gmra.mrb[0].mxu0 %v1567
    %v1946 = vpop.f32.mrb[0].mxu0
    %v1947 = vadd.f32 %v1859, %v1946
    %v1948 = vpop.f32.mrb[0].mxu0
    %v1949 = vpop.f32.mrb[0].mxu0
    %v1950 = vpop.f32.mrb[0].mxu0
    %1951 = vdwg.mxu0
    %v1953 = vlaneseq
    %v1954 = vshrl.u32 %v1953, 7
    %v1955 = vsub.s32 0, %v1954
    %v1956 = vrot.slane %v87, %v1955
    %v1958 = vadd.f32 %v1947, %v1956
    %vm1959 = vcmask 64512
    %1960 = vst.msk [vmem:[#allocation10] sm:$0xff] %vm1959, %v1958
    // Predicated region
    $region46: #{tpu_custom_call.1} parent=1 // pred_check
      _
    $region47: #{tpu_custom_call.1} parent=1 // pred_check_branch
      %1962 = sbr.rel (0) target = $region49
    $region48: #{tpu_custom_call.1} parent=1 // pred_region
      %s1964 = ssub.s32 128, 128
      %1965 = vsyncadd [#allocation4], %s1964
      %s1967 = sshll.u32 [#allocation10], 4
      %s1968 = int_to_ptr.vmem [resolvable:$true] %s1967
      %1970 = dma.vmem_to_hbm [thread:$0]  %s1968, 128, %s7, [#allocation4]
    $region49: #{tpu_custom_call.1} parent=1 // pred_fallthru
      _
    // Predicated region
    $region50: #{tpu_custom_call.1} parent=1 // pred_check
      _
    $region51: #{tpu_custom_call.1} parent=1 // pred_check_branch
      %1972 = sbr.rel (0) target = $region53
    $region52: #{tpu_custom_call.1} parent=1 // pred_region
      %1973 = dma.done [#allocation4], 128
    $region53: #{tpu_custom_call.1} parent=1 // pred_fallthru
      _
    %1974 = vsyncpa [#allocation3], 1
    %1975 = vsyncpa [#allocation6], 1
    %1976 = vsyncpa [#allocation9], 1
    %1977 = vsyncpa [#allocation4], 1

</llo_original>
